<compile_context>
chip_gen: v5e
topology: v5e:2x2
jax: 0.10.0
libtpu: 0.0.40
codegen_flags: <defaults>
</compile_context>

<pallas_src>
import functools

import jax
import jax.numpy as jnp
from jax.experimental import pallas as pl
from jax.experimental.pallas import tpu as pltpu


def _lstm_classifier_kernel(num_layers, hidden_dim, seq_len,
                            x_ref, w_ih0_ref, w_hh0_ref, b0_ref, *refs):
    """Full LSTM recurrence (all layers, all timesteps) + MLP head.

    Ref layout (all VMEM):
      x_ref     : (T*B, D)      time-major, flattened over (T, B)
      w_ih0_ref : (D, 4H)       layer-0 input weights (transposed vs PyTorch)
      w_hh0_ref : (H, 4H)       layer-0 recurrent weights
      b0_ref    : (1, 4H)       layer-0 bias (b_ih + b_hh)
      then per layer l in [1, num_layers):
        w_ih_l : (H, 4H)        input weights (from layer below's h)
        w_hh_l : (H, 4H)        recurrent weights
        b_l    : (1, 4H)
      head: w1 (H, H//2), b1 (1, H//2), w2 (H//2, O), b2 (1, O)
      out_ref   : (B, O)
    """
    n_layer_refs = 3 * (num_layers - 1)
    layer_refs = refs[:n_layer_refs]
    w1_ref, b1_ref, w2_ref, b2_ref, out_ref = refs[n_layer_refs:]

    H = hidden_dim
    T = seq_len
    B = out_ref.shape[0]

    # ---------------- hoisted work (off the serial critical path) ------------
    # Layer-0 input projection for every timestep at once, bias folded in.
    # Kept as a plain value: (T*B, 4H) f32 = 8 vregs at demo shapes, well
    # inside the vreg budget -> no VMEM scratch round-trip.
    x_bf = x_ref[...].astype(jnp.bfloat16)                       # (T*B, D)
    w_ih0 = w_ih0_ref[...].astype(jnp.bfloat16)                  # (D, 4H)
    xproj = (jnp.dot(x_bf, w_ih0, preferred_element_type=jnp.float32)
             + b0_ref[...])                                      # (T*B, 4H) f32

    # Weights cast to bf16 once; biases pre-broadcast once (broadcast_in_dim is
    # not CSE'd, so do NOT re-emit it inside the unrolled loop).
    w_hh0 = w_hh0_ref[...].astype(jnp.bfloat16)                  # (H, 4H)
    w_ih_l = [layer_refs[3 * i][...].astype(jnp.bfloat16)        # (H, 4H)
              for i in range(num_layers - 1)]
    w_hh_l = [layer_refs[3 * i + 1][...].astype(jnp.bfloat16)    # (H, 4H)
              for i in range(num_layers - 1)]
    b_l = [jnp.broadcast_to(layer_refs[3 * i + 2][...], (B, 4 * H))
           for i in range(num_layers - 1)]                       # (B, 4H) f32

    def sigmoid(v):
        # sigmoid(x) == 0.5*tanh(0.5*x) + 0.5 exactly; one EUP op + one fma,
        # avoiding the multi-op VPU divide in jax.nn.sigmoid's lowering.
        return 0.5 * jnp.tanh(0.5 * v) + 0.5

    def gates(z, c_prev):
        # Gate order i, f, g, o (PyTorch convention); all gate math in f32.
        i_g = sigmoid(z[:, 0:H])
        f_g = sigmoid(z[:, H:2 * H])
        g_g = jnp.tanh(z[:, 2 * H:3 * H])
        o_g = sigmoid(z[:, 3 * H:4 * H])
        c = f_g * c_prev + i_g * g_g
        h = o_g * jnp.tanh(c)
        return h, c

    # ---------------- serial recurrence --------------------------------------
    hs = [jnp.zeros((B, H), jnp.float32) for _ in range(num_layers)]
    cs = [jnp.zeros((B, H), jnp.float32) for _ in range(num_layers)]

    # Static unroll over T (small & static): static sublane-aligned slices of
    # xproj, cross-step scheduling visibility for the LLO scheduler.
    for t in range(T):
        xp_t = xproj[t * B:(t + 1) * B, :]                       # (B, 4H) f32

        # Layer 0: only the recurrent matmul remains on the critical path.
        z0 = xp_t + jnp.dot(hs[0].astype(jnp.bfloat16), w_hh0,
                            preferred_element_type=jnp.float32)
        h, c = gates(z0, cs[0])
        hs[0], cs[0] = h, c
        inp = h

        # Layers >= 1: two un-fused matmuls (no lane-axis concat on the chain).
        # TODO(synk): nn.LSTM inter-layer dropout(0.5) is identity in eval mode.
        for l in range(1, num_layers):
            z = (jnp.dot(inp.astype(jnp.bfloat16), w_ih_l[l - 1],
                         preferred_element_type=jnp.float32)
                 + jnp.dot(hs[l].astype(jnp.bfloat16), w_hh_l[l - 1],
                           preferred_element_type=jnp.float32)
                 + b_l[l - 1])
            h, c = gates(z, cs[l])
            hs[l], cs[l] = h, c
            inp = h

    # x[:, -1, :] of the top-layer LSTM outputs == final hidden of last layer.
    last = hs[num_layers - 1]                                    # (B, H)

    # hidden2label: Linear -> ReLU -> (Dropout=identity at eval) -> Linear
    z1 = jnp.maximum(
        jnp.dot(last.astype(jnp.bfloat16), w1_ref[...].astype(jnp.bfloat16),
                preferred_element_type=jnp.float32) + b1_ref[...],
        0.0,
    )
    out = jnp.dot(z1.astype(jnp.bfloat16), w2_ref[...].astype(jnp.bfloat16),
                  preferred_element_type=jnp.float32) + b2_ref[...]
    out_ref[...] = out.astype(out_ref.dtype)


def lstm_classifier_forward(x, params, *, num_layers, hidden_dim, seq_len,
                            batch_size, output_dim):
    input_dim = params["w_ih"][0].shape[0]
    # PyTorch: x = x.reshape(batch_size, seq_len, num_feats * 21)
    x = x.reshape(batch_size, seq_len, input_dim).astype(jnp.float32)
    # Time-major, flattened over (T, B) for the hoisted layer-0 projection.
    x_tm = jnp.transpose(x, (1, 0, 2)).reshape(seq_len * batch_size, input_dim)

    args = [x_tm, params["w_ih"][0], params["w_hh"][0], params["b"][0]]
    for l in range(1, num_layers):
        args += [params["w_ih"][l], params["w_hh"][l], params["b"][l]]
    args += [params["w1"], params["b1"], params["w2"], params["b2"]]

    kernel = functools.partial(_lstm_classifier_kernel, num_layers, hidden_dim,
                               seq_len)
    vmem = pl.BlockSpec(memory_space=pltpu.MemorySpace.VMEM)
    # Everything resident is <100 KiB, far under the scoped-VMEM default on
    # every generation (v5e/v6e/v7x); no grid / BlockSpec tiling needed.
    return pl.pallas_call(
        kernel,
        out_shape=jax.ShapeDtypeStruct((batch_size, output_dim), jnp.float32),
        in_specs=[vmem] * len(args),
        out_specs=vmem,
    )(*args)


def init_params(key, input_dim, hidden_dim, output_dim, num_layers):
    """Deterministic synthetic init mirroring PyTorch param shapes (transposed)."""
    params = {"w_ih": [], "w_hh": [], "b": []}
    k = 1.0 / jnp.sqrt(jnp.float32(hidden_dim))
    keys = jax.random.split(key, 4 * num_layers + 4)
    ki = 0
    for l in range(num_layers):
        d_in = input_dim if l == 0 else hidden_dim
        params["w_ih"].append(
            jax.random.uniform(keys[ki], (d_in, 4 * hidden_dim), jnp.float32, -k, k)); ki += 1
        params["w_hh"].append(
            jax.random.uniform(keys[ki], (hidden_dim, 4 * hidden_dim), jnp.float32, -k, k)); ki += 1
        b_ih = jax.random.uniform(keys[ki], (1, 4 * hidden_dim), jnp.float32, -k, k); ki += 1
        b_hh = jax.random.uniform(keys[ki], (1, 4 * hidden_dim), jnp.float32, -k, k); ki += 1
        params["b"].append(b_ih + b_hh)
    half = hidden_dim // 2
    k1 = 1.0 / jnp.sqrt(jnp.float32(hidden_dim))
    k2 = 1.0 / jnp.sqrt(jnp.float32(half))
    params["w1"] = jax.random.uniform(keys[ki], (hidden_dim, half), jnp.float32, -k1, k1); ki += 1
    params["b1"] = jax.random.uniform(keys[ki], (1, half), jnp.float32, -k1, k1); ki += 1
    params["w2"] = jax.random.uniform(keys[ki], (half, output_dim), jnp.float32, -k2, k2); ki += 1
    params["b2"] = jax.random.uniform(keys[ki], (1, output_dim), jnp.float32, -k2, k2); ki += 1
    return params


if __name__ == "__main__":
    batch_size = 8            # fills all 8 sublanes
    seq_len = 8
    num_feats = 2
    input_dim = num_feats * 21      # 42 (== CFG.num_feats * 21)
    hidden_dim = 32
    output_dim = 4
    num_layers = 2

    root = jax.random.PRNGKey(0)
    kx, kp = jax.random.split(root)
    params = init_params(kp, input_dim, hidden_dim, output_dim, num_layers)
    x = jax.random.normal(kx, (batch_size, seq_len, input_dim), jnp.float32)

    out = lstm_classifier_forward(
        x, params,
        num_layers=num_layers, hidden_dim=hidden_dim, seq_len=seq_len,
        batch_size=batch_size, output_dim=output_dim,
    )
    jax.block_until_ready(out)
    assert out.shape == (batch_size, output_dim)
    print("KERNEL_OK")
</pallas_src>

<mosaic_0001>
module attributes {stable_mosaic.version = 11 : i64} {
  func.func @_lstm_classifier_kernel(%arg0: memref<64x42xf32, #tpu.memory_space<vmem>>, %arg1: memref<42x128xf32, #tpu.memory_space<vmem>>, %arg2: memref<32x128xf32, #tpu.memory_space<vmem>>, %arg3: memref<1x128xf32, #tpu.memory_space<vmem>>, %arg4: memref<32x128xf32, #tpu.memory_space<vmem>>, %arg5: memref<32x128xf32, #tpu.memory_space<vmem>>, %arg6: memref<1x128xf32, #tpu.memory_space<vmem>>, %arg7: memref<32x16xf32, #tpu.memory_space<vmem>>, %arg8: memref<1x16xf32, #tpu.memory_space<vmem>>, %arg9: memref<16x4xf32, #tpu.memory_space<vmem>>, %arg10: memref<1x4xf32, #tpu.memory_space<vmem>>, %arg11: memref<8x4xf32, #tpu.memory_space<vmem>>) attributes {dimension_semantics = [], scalar_prefetch = 0 : i64, scratch_operands = 0 : i64, tpu.core_type = #tpu.core_type<tc>} {
    %c0 = arith.constant 0 : index
    %c0_0 = arith.constant 0 : index
    %0 = vector.load %arg0[%c0, %c0_0] : memref<64x42xf32, #tpu.memory_space<vmem>>, vector<64x42xf32>
    %1 = arith.truncf %0 : vector<64x42xf32> to vector<64x42xbf16>
    %c0_1 = arith.constant 0 : index
    %c0_2 = arith.constant 0 : index
    %2 = vector.load %arg1[%c0_1, %c0_2] : memref<42x128xf32, #tpu.memory_space<vmem>>, vector<42x128xf32>
    %3 = arith.truncf %2 : vector<42x128xf32> to vector<42x128xbf16>
    %cst = arith.constant dense<0.000000e+00> : vector<64x128xf32>
    %4 = tpu.matmul %1, %3, %cst {dimension_numbers = #tpu.dot_dimension_numbers<[1], [0], [0], [1], [0, 0, 1, 1], [], []>} : vector<64x42xbf16>, vector<42x128xbf16>, vector<64x128xf32> -> vector<64x128xf32>
    %c0_3 = arith.constant 0 : index
    %c0_4 = arith.constant 0 : index
    %5 = vector.load %arg3[%c0_3, %c0_4] : memref<1x128xf32, #tpu.memory_space<vmem>>, vector<1x128xf32>
    %6 = vector.broadcast %5 : vector<1x128xf32> to vector<64x128xf32>
    %7 = arith.addf %4, %6 : vector<64x128xf32>
    %c0_5 = arith.constant 0 : index
    %c0_6 = arith.constant 0 : index
    %8 = vector.load %arg2[%c0_5, %c0_6] : memref<32x128xf32, #tpu.memory_space<vmem>>, vector<32x128xf32>
    %9 = arith.truncf %8 : vector<32x128xf32> to vector<32x128xbf16>
    %c0_7 = arith.constant 0 : index
    %c0_8 = arith.constant 0 : index
    %10 = vector.load %arg4[%c0_7, %c0_8] : memref<32x128xf32, #tpu.memory_space<vmem>>, vector<32x128xf32>
    %11 = arith.truncf %10 : vector<32x128xf32> to vector<32x128xbf16>
    %c0_9 = arith.constant 0 : index
    %c0_10 = arith.constant 0 : index
    %12 = vector.load %arg5[%c0_9, %c0_10] : memref<32x128xf32, #tpu.memory_space<vmem>>, vector<32x128xf32>
    %13 = arith.truncf %12 : vector<32x128xf32> to vector<32x128xbf16>
    %c0_11 = arith.constant 0 : index
    %c0_12 = arith.constant 0 : index
    %14 = vector.load %arg6[%c0_11, %c0_12] : memref<1x128xf32, #tpu.memory_space<vmem>>, vector<1x128xf32>
    %15 = vector.shape_cast %14 : vector<1x128xf32> to vector<1x128xf32>
    %16 = vector.broadcast %15 : vector<1x128xf32> to vector<8x128xf32>
    %cst_13 = arith.constant 0.000000e+00 : f32
    %17 = vector.broadcast %cst_13 : f32 to vector<8x32xf32>
    %cst_14 = arith.constant 0.000000e+00 : f32
    %18 = vector.broadcast %cst_14 : f32 to vector<8x32xf32>
    %cst_15 = arith.constant 0.000000e+00 : f32
    %19 = vector.broadcast %cst_15 : f32 to vector<8x32xf32>
    %cst_16 = arith.constant 0.000000e+00 : f32
    %20 = vector.broadcast %cst_16 : f32 to vector<8x32xf32>
    %21 = vector.extract_strided_slice %7 {offsets = [0, 0], sizes = [8, 128], strides = [1, 1]} : vector<64x128xf32> to vector<8x128xf32>
    %22 = arith.truncf %17 : vector<8x32xf32> to vector<8x32xbf16>
    %cst_17 = arith.constant dense<0.000000e+00> : vector<8x128xf32>
    %23 = tpu.matmul %22, %9, %cst_17 {dimension_numbers = #tpu.dot_dimension_numbers<[1], [0], [0], [1], [0, 0, 1, 1], [], []>} : vector<8x32xbf16>, vector<32x128xbf16>, vector<8x128xf32> -> vector<8x128xf32>
    %24 = arith.addf %21, %23 : vector<8x128xf32>
    %25 = vector.extract_strided_slice %24 {offsets = [0, 0], sizes = [8, 32], strides = [1, 1]} : vector<8x128xf32> to vector<8x32xf32>
    %cst_18 = arith.constant 5.000000e-01 : f32
    %26 = vector.broadcast %cst_18 : f32 to vector<8x32xf32>
    %27 = arith.mulf %26, %25 : vector<8x32xf32>
    %28 = math.tanh %27 : vector<8x32xf32>
    %cst_19 = arith.constant 5.000000e-01 : f32
    %29 = vector.broadcast %cst_19 : f32 to vector<8x32xf32>
    %30 = arith.mulf %29, %28 : vector<8x32xf32>
    %cst_20 = arith.constant 5.000000e-01 : f32
    %31 = vector.broadcast %cst_20 : f32 to vector<8x32xf32>
    %32 = arith.addf %30, %31 : vector<8x32xf32>
    %33 = vector.extract_strided_slice %24 {offsets = [0, 32], sizes = [8, 32], strides = [1, 1]} : vector<8x128xf32> to vector<8x32xf32>
    %cst_21 = arith.constant 5.000000e-01 : f32
    %34 = vector.broadcast %cst_21 : f32 to vector<8x32xf32>
    %35 = arith.mulf %34, %33 : vector<8x32xf32>
    %36 = math.tanh %35 : vector<8x32xf32>
    %cst_22 = arith.constant 5.000000e-01 : f32
    %37 = vector.broadcast %cst_22 : f32 to vector<8x32xf32>
    %38 = arith.mulf %37, %36 : vector<8x32xf32>
    %cst_23 = arith.constant 5.000000e-01 : f32
    %39 = vector.broadcast %cst_23 : f32 to vector<8x32xf32>
    %40 = arith.addf %38, %39 : vector<8x32xf32>
    %41 = vector.extract_strided_slice %24 {offsets = [0, 64], sizes = [8, 32], strides = [1, 1]} : vector<8x128xf32> to vector<8x32xf32>
    %42 = math.tanh %41 : vector<8x32xf32>
    %43 = vector.extract_strided_slice %24 {offsets = [0, 96], sizes = [8, 32], strides = [1, 1]} : vector<8x128xf32> to vector<8x32xf32>
    %cst_24 = arith.constant 5.000000e-01 : f32
    %44 = vector.broadcast %cst_24 : f32 to vector<8x32xf32>
    %45 = arith.mulf %44, %43 : vector<8x32xf32>
    %46 = math.tanh %45 : vector<8x32xf32>
    %cst_25 = arith.constant 5.000000e-01 : f32
    %47 = vector.broadcast %cst_25 : f32 to vector<8x32xf32>
    %48 = arith.mulf %47, %46 : vector<8x32xf32>
    %cst_26 = arith.constant 5.000000e-01 : f32
    %49 = vector.broadcast %cst_26 : f32 to vector<8x32xf32>
    %50 = arith.addf %48, %49 : vector<8x32xf32>
    %51 = arith.mulf %40, %19 : vector<8x32xf32>
    %52 = arith.mulf %32, %42 : vector<8x32xf32>
    %53 = arith.addf %51, %52 : vector<8x32xf32>
    %54 = math.tanh %53 : vector<8x32xf32>
    %55 = arith.mulf %50, %54 : vector<8x32xf32>
    %56 = arith.truncf %55 : vector<8x32xf32> to vector<8x32xbf16>
    %cst_27 = arith.constant dense<0.000000e+00> : vector<8x128xf32>
    %57 = tpu.matmul %56, %11, %cst_27 {dimension_numbers = #tpu.dot_dimension_numbers<[1], [0], [0], [1], [0, 0, 1, 1], [], []>} : vector<8x32xbf16>, vector<32x128xbf16>, vector<8x128xf32> -> vector<8x128xf32>
    %58 = arith.truncf %18 : vector<8x32xf32> to vector<8x32xbf16>
    %cst_28 = arith.constant dense<0.000000e+00> : vector<8x128xf32>
    %59 = tpu.matmul %58, %13, %cst_28 {dimension_numbers = #tpu.dot_dimension_numbers<[1], [0], [0], [1], [0, 0, 1, 1], [], []>} : vector<8x32xbf16>, vector<32x128xbf16>, vector<8x128xf32> -> vector<8x128xf32>
    %60 = arith.addf %57, %59 : vector<8x128xf32>
    %61 = arith.addf %60, %16 : vector<8x128xf32>
    %62 = vector.extract_strided_slice %61 {offsets = [0, 0], sizes = [8, 32], strides = [1, 1]} : vector<8x128xf32> to vector<8x32xf32>
    %cst_29 = arith.constant 5.000000e-01 : f32
    %63 = vector.broadcast %cst_29 : f32 to vector<8x32xf32>
    %64 = arith.mulf %63, %62 : vector<8x32xf32>
    %65 = math.tanh %64 : vector<8x32xf32>
    %cst_30 = arith.constant 5.000000e-01 : f32
    %66 = vector.broadcast %cst_30 : f32 to vector<8x32xf32>
    %67 = arith.mulf %66, %65 : vector<8x32xf32>
    %cst_31 = arith.constant 5.000000e-01 : f32
    %68 = vector.broadcast %cst_31 : f32 to vector<8x32xf32>
    %69 = arith.addf %67, %68 : vector<8x32xf32>
    %70 = vector.extract_strided_slice %61 {offsets = [0, 32], sizes = [8, 32], strides = [1, 1]} : vector<8x128xf32> to vector<8x32xf32>
    %cst_32 = arith.constant 5.000000e-01 : f32
    %71 = vector.broadcast %cst_32 : f32 to vector<8x32xf32>
    %72 = arith.mulf %71, %70 : vector<8x32xf32>
    %73 = math.tanh %72 : vector<8x32xf32>
    %cst_33 = arith.constant 5.000000e-01 : f32
    %74 = vector.broadcast %cst_33 : f32 to vector<8x32xf32>
    %75 = arith.mulf %74, %73 : vector<8x32xf32>
    %cst_34 = arith.constant 5.000000e-01 : f32
    %76 = vector.broadcast %cst_34 : f32 to vector<8x32xf32>
    %77 = arith.addf %75, %76 : vector<8x32xf32>
    %78 = vector.extract_strided_slice %61 {offsets = [0, 64], sizes = [8, 32], strides = [1, 1]} : vector<8x128xf32> to vector<8x32xf32>
    %79 = math.tanh %78 : vector<8x32xf32>
    %80 = vector.extract_strided_slice %61 {offsets = [0, 96], sizes = [8, 32], strides = [1, 1]} : vector<8x128xf32> to vector<8x32xf32>
    %cst_35 = arith.constant 5.000000e-01 : f32
    %81 = vector.broadcast %cst_35 : f32 to vector<8x32xf32>
    %82 = arith.mulf %81, %80 : vector<8x32xf32>
    %83 = math.tanh %82 : vector<8x32xf32>
    %cst_36 = arith.constant 5.000000e-01 : f32
    %84 = vector.broadcast %cst_36 : f32 to vector<8x32xf32>
    %85 = arith.mulf %84, %83 : vector<8x32xf32>
    %cst_37 = arith.constant 5.000000e-01 : f32
    %86 = vector.broadcast %cst_37 : f32 to vector<8x32xf32>
    %87 = arith.addf %85, %86 : vector<8x32xf32>
    %88 = arith.mulf %77, %20 : vector<8x32xf32>
    %89 = arith.mulf %69, %79 : vector<8x32xf32>
    %90 = arith.addf %88, %89 : vector<8x32xf32>
    %91 = math.tanh %90 : vector<8x32xf32>
    %92 = arith.mulf %87, %91 : vector<8x32xf32>
    %93 = vector.extract_strided_slice %7 {offsets = [8, 0], sizes = [8, 128], strides = [1, 1]} : vector<64x128xf32> to vector<8x128xf32>
    %94 = arith.truncf %55 : vector<8x32xf32> to vector<8x32xbf16>
    %cst_38 = arith.constant dense<0.000000e+00> : vector<8x128xf32>
    %95 = tpu.matmul %94, %9, %cst_38 {dimension_numbers = #tpu.dot_dimension_numbers<[1], [0], [0], [1], [0, 0, 1, 1], [], []>} : vector<8x32xbf16>, vector<32x128xbf16>, vector<8x128xf32> -> vector<8x128xf32>
    %96 = arith.addf %93, %95 : vector<8x128xf32>
    %97 = vector.extract_strided_slice %96 {offsets = [0, 0], sizes = [8, 32], strides = [1, 1]} : vector<8x128xf32> to vector<8x32xf32>
    %cst_39 = arith.constant 5.000000e-01 : f32
    %98 = vector.broadcast %cst_39 : f32 to vector<8x32xf32>
    %99 = arith.mulf %98, %97 : vector<8x32xf32>
    %100 = math.tanh %99 : vector<8x32xf32>
    %cst_40 = arith.constant 5.000000e-01 : f32
    %101 = vector.broadcast %cst_40 : f32 to vector<8x32xf32>
    %102 = arith.mulf %101, %100 : vector<8x32xf32>
    %cst_41 = arith.constant 5.000000e-01 : f32
    %103 = vector.broadcast %cst_41 : f32 to vector<8x32xf32>
    %104 = arith.addf %102, %103 : vector<8x32xf32>
    %105 = vector.extract_strided_slice %96 {offsets = [0, 32], sizes = [8, 32], strides = [1, 1]} : vector<8x128xf32> to vector<8x32xf32>
    %cst_42 = arith.constant 5.000000e-01 : f32
    %106 = vector.broadcast %cst_42 : f32 to vector<8x32xf32>
    %107 = arith.mulf %106, %105 : vector<8x32xf32>
    %108 = math.tanh %107 : vector<8x32xf32>
    %cst_43 = arith.constant 5.000000e-01 : f32
    %109 = vector.broadcast %cst_43 : f32 to vector<8x32xf32>
    %110 = arith.mulf %109, %108 : vector<8x32xf32>
    %cst_44 = arith.constant 5.000000e-01 : f32
    %111 = vector.broadcast %cst_44 : f32 to vector<8x32xf32>
    %112 = arith.addf %110, %111 : vector<8x32xf32>
    %113 = vector.extract_strided_slice %96 {offsets = [0, 64], sizes = [8, 32], strides = [1, 1]} : vector<8x128xf32> to vector<8x32xf32>
    %114 = math.tanh %113 : vector<8x32xf32>
    %115 = vector.extract_strided_slice %96 {offsets = [0, 96], sizes = [8, 32], strides = [1, 1]} : vector<8x128xf32> to vector<8x32xf32>
    %cst_45 = arith.constant 5.000000e-01 : f32
    %116 = vector.broadcast %cst_45 : f32 to vector<8x32xf32>
    %117 = arith.mulf %116, %115 : vector<8x32xf32>
    %118 = math.tanh %117 : vector<8x32xf32>
    %cst_46 = arith.constant 5.000000e-01 : f32
    %119 = vector.broadcast %cst_46 : f32 to vector<8x32xf32>
    %120 = arith.mulf %119, %118 : vector<8x32xf32>
    %cst_47 = arith.constant 5.000000e-01 : f32
    %121 = vector.broadcast %cst_47 : f32 to vector<8x32xf32>
    %122 = arith.addf %120, %121 : vector<8x32xf32>
    %123 = arith.mulf %112, %53 : vector<8x32xf32>
    %124 = arith.mulf %104, %114 : vector<8x32xf32>
    %125 = arith.addf %123, %124 : vector<8x32xf32>
    %126 = math.tanh %125 : vector<8x32xf32>
    %127 = arith.mulf %122, %126 : vector<8x32xf32>
    %128 = arith.truncf %127 : vector<8x32xf32> to vector<8x32xbf16>
    %cst_48 = arith.constant dense<0.000000e+00> : vector<8x128xf32>
    %129 = tpu.matmul %128, %11, %cst_48 {dimension_numbers = #tpu.dot_dimension_numbers<[1], [0], [0], [1], [0, 0, 1, 1], [], []>} : vector<8x32xbf16>, vector<32x128xbf16>, vector<8x128xf32> -> vector<8x128xf32>
    %130 = arith.truncf %92 : vector<8x32xf32> to vector<8x32xbf16>
    %cst_49 = arith.constant dense<0.000000e+00> : vector<8x128xf32>
    %131 = tpu.matmul %130, %13, %cst_49 {dimension_numbers = #tpu.dot_dimension_numbers<[1], [0], [0], [1], [0, 0, 1, 1], [], []>} : vector<8x32xbf16>, vector<32x128xbf16>, vector<8x128xf32> -> vector<8x128xf32>
    %132 = arith.addf %129, %131 : vector<8x128xf32>
    %133 = arith.addf %132, %16 : vector<8x128xf32>
    %134 = vector.extract_strided_slice %133 {offsets = [0, 0], sizes = [8, 32], strides = [1, 1]} : vector<8x128xf32> to vector<8x32xf32>
    %cst_50 = arith.constant 5.000000e-01 : f32
    %135 = vector.broadcast %cst_50 : f32 to vector<8x32xf32>
    %136 = arith.mulf %135, %134 : vector<8x32xf32>
    %137 = math.tanh %136 : vector<8x32xf32>
    %cst_51 = arith.constant 5.000000e-01 : f32
    %138 = vector.broadcast %cst_51 : f32 to vector<8x32xf32>
    %139 = arith.mulf %138, %137 : vector<8x32xf32>
    %cst_52 = arith.constant 5.000000e-01 : f32
    %140 = vector.broadcast %cst_52 : f32 to vector<8x32xf32>
    %141 = arith.addf %139, %140 : vector<8x32xf32>
    %142 = vector.extract_strided_slice %133 {offsets = [0, 32], sizes = [8, 32], strides = [1, 1]} : vector<8x128xf32> to vector<8x32xf32>
    %cst_53 = arith.constant 5.000000e-01 : f32
    %143 = vector.broadcast %cst_53 : f32 to vector<8x32xf32>
    %144 = arith.mulf %143, %142 : vector<8x32xf32>
    %145 = math.tanh %144 : vector<8x32xf32>
    %cst_54 = arith.constant 5.000000e-01 : f32
    %146 = vector.broadcast %cst_54 : f32 to vector<8x32xf32>
    %147 = arith.mulf %146, %145 : vector<8x32xf32>
    %cst_55 = arith.constant 5.000000e-01 : f32
    %148 = vector.broadcast %cst_55 : f32 to vector<8x32xf32>
    %149 = arith.addf %147, %148 : vector<8x32xf32>
    %150 = vector.extract_strided_slice %133 {offsets = [0, 64], sizes = [8, 32], strides = [1, 1]} : vector<8x128xf32> to vector<8x32xf32>
    %151 = math.tanh %150 : vector<8x32xf32>
    %152 = vector.extract_strided_slice %133 {offsets = [0, 96], sizes = [8, 32], strides = [1, 1]} : vector<8x128xf32> to vector<8x32xf32>
    %cst_56 = arith.constant 5.000000e-01 : f32
    %153 = vector.broadcast %cst_56 : f32 to vector<8x32xf32>
    %154 = arith.mulf %153, %152 : vector<8x32xf32>
    %155 = math.tanh %154 : vector<8x32xf32>
    %cst_57 = arith.constant 5.000000e-01 : f32
    %156 = vector.broadcast %cst_57 : f32 to vector<8x32xf32>
    %157 = arith.mulf %156, %155 : vector<8x32xf32>
    %cst_58 = arith.constant 5.000000e-01 : f32
    %158 = vector.broadcast %cst_58 : f32 to vector<8x32xf32>
    %159 = arith.addf %157, %158 : vector<8x32xf32>
    %160 = arith.mulf %149, %90 : vector<8x32xf32>
    %161 = arith.mulf %141, %151 : vector<8x32xf32>
    %162 = arith.addf %160, %161 : vector<8x32xf32>
    %163 = math.tanh %162 : vector<8x32xf32>
    %164 = arith.mulf %159, %163 : vector<8x32xf32>
    %165 = vector.extract_strided_slice %7 {offsets = [16, 0], sizes = [8, 128], strides = [1, 1]} : vector<64x128xf32> to vector<8x128xf32>
    %166 = arith.truncf %127 : vector<8x32xf32> to vector<8x32xbf16>
    %cst_59 = arith.constant dense<0.000000e+00> : vector<8x128xf32>
    %167 = tpu.matmul %166, %9, %cst_59 {dimension_numbers = #tpu.dot_dimension_numbers<[1], [0], [0], [1], [0, 0, 1, 1], [], []>} : vector<8x32xbf16>, vector<32x128xbf16>, vector<8x128xf32> -> vector<8x128xf32>
    %168 = arith.addf %165, %167 : vector<8x128xf32>
    %169 = vector.extract_strided_slice %168 {offsets = [0, 0], sizes = [8, 32], strides = [1, 1]} : vector<8x128xf32> to vector<8x32xf32>
    %cst_60 = arith.constant 5.000000e-01 : f32
    %170 = vector.broadcast %cst_60 : f32 to vector<8x32xf32>
    %171 = arith.mulf %170, %169 : vector<8x32xf32>
    %172 = math.tanh %171 : vector<8x32xf32>
    %cst_61 = arith.constant 5.000000e-01 : f32
    %173 = vector.broadcast %cst_61 : f32 to vector<8x32xf32>
    %174 = arith.mulf %173, %172 : vector<8x32xf32>
    %cst_62 = arith.constant 5.000000e-01 : f32
    %175 = vector.broadcast %cst_62 : f32 to vector<8x32xf32>
    %176 = arith.addf %174, %175 : vector<8x32xf32>
    %177 = vector.extract_strided_slice %168 {offsets = [0, 32], sizes = [8, 32], strides = [1, 1]} : vector<8x128xf32> to vector<8x32xf32>
    %cst_63 = arith.constant 5.000000e-01 : f32
    %178 = vector.broadcast %cst_63 : f32 to vector<8x32xf32>
    %179 = arith.mulf %178, %177 : vector<8x32xf32>
    %180 = math.tanh %179 : vector<8x32xf32>
    %cst_64 = arith.constant 5.000000e-01 : f32
    %181 = vector.broadcast %cst_64 : f32 to vector<8x32xf32>
    %182 = arith.mulf %181, %180 : vector<8x32xf32>
    %cst_65 = arith.constant 5.000000e-01 : f32
    %183 = vector.broadcast %cst_65 : f32 to vector<8x32xf32>
    %184 = arith.addf %182, %183 : vector<8x32xf32>
    %185 = vector.extract_strided_slice %168 {offsets = [0, 64], sizes = [8, 32], strides = [1, 1]} : vector<8x128xf32> to vector<8x32xf32>
    %186 = math.tanh %185 : vector<8x32xf32>
    %187 = vector.extract_strided_slice %168 {offsets = [0, 96], sizes = [8, 32], strides = [1, 1]} : vector<8x128xf32> to vector<8x32xf32>
    %cst_66 = arith.constant 5.000000e-01 : f32
    %188 = vector.broadcast %cst_66 : f32 to vector<8x32xf32>
    %189 = arith.mulf %188, %187 : vector<8x32xf32>
    %190 = math.tanh %189 : vector<8x32xf32>
    %cst_67 = arith.constant 5.000000e-01 : f32
    %191 = vector.broadcast %cst_67 : f32 to vector<8x32xf32>
    %192 = arith.mulf %191, %190 : vector<8x32xf32>
    %cst_68 = arith.constant 5.000000e-01 : f32
    %193 = vector.broadcast %cst_68 : f32 to vector<8x32xf32>
    %194 = arith.addf %192, %193 : vector<8x32xf32>
    %195 = arith.mulf %184, %125 : vector<8x32xf32>
    %196 = arith.mulf %176, %186 : vector<8x32xf32>
    %197 = arith.addf %195, %196 : vector<8x32xf32>
    %198 = math.tanh %197 : vector<8x32xf32>
    %199 = arith.mulf %194, %198 : vector<8x32xf32>
    %200 = arith.truncf %199 : vector<8x32xf32> to vector<8x32xbf16>
    %cst_69 = arith.constant dense<0.000000e+00> : vector<8x128xf32>
    %201 = tpu.matmul %200, %11, %cst_69 {dimension_numbers = #tpu.dot_dimension_numbers<[1], [0], [0], [1], [0, 0, 1, 1], [], []>} : vector<8x32xbf16>, vector<32x128xbf16>, vector<8x128xf32> -> vector<8x128xf32>
    %202 = arith.truncf %164 : vector<8x32xf32> to vector<8x32xbf16>
    %cst_70 = arith.constant dense<0.000000e+00> : vector<8x128xf32>
    %203 = tpu.matmul %202, %13, %cst_70 {dimension_numbers = #tpu.dot_dimension_numbers<[1], [0], [0], [1], [0, 0, 1, 1], [], []>} : vector<8x32xbf16>, vector<32x128xbf16>, vector<8x128xf32> -> vector<8x128xf32>
    %204 = arith.addf %201, %203 : vector<8x128xf32>
    %205 = arith.addf %204, %16 : vector<8x128xf32>
    %206 = vector.extract_strided_slice %205 {offsets = [0, 0], sizes = [8, 32], strides = [1, 1]} : vector<8x128xf32> to vector<8x32xf32>
    %cst_71 = arith.constant 5.000000e-01 : f32
    %207 = vector.broadcast %cst_71 : f32 to vector<8x32xf32>
    %208 = arith.mulf %207, %206 : vector<8x32xf32>
    %209 = math.tanh %208 : vector<8x32xf32>
    %cst_72 = arith.constant 5.000000e-01 : f32
    %210 = vector.broadcast %cst_72 : f32 to vector<8x32xf32>
    %211 = arith.mulf %210, %209 : vector<8x32xf32>
    %cst_73 = arith.constant 5.000000e-01 : f32
    %212 = vector.broadcast %cst_73 : f32 to vector<8x32xf32>
    %213 = arith.addf %211, %212 : vector<8x32xf32>
    %214 = vector.extract_strided_slice %205 {offsets = [0, 32], sizes = [8, 32], strides = [1, 1]} : vector<8x128xf32> to vector<8x32xf32>
    %cst_74 = arith.constant 5.000000e-01 : f32
    %215 = vector.broadcast %cst_74 : f32 to vector<8x32xf32>
    %216 = arith.mulf %215, %214 : vector<8x32xf32>
    %217 = math.tanh %216 : vector<8x32xf32>
    %cst_75 = arith.constant 5.000000e-01 : f32
    %218 = vector.broadcast %cst_75 : f32 to vector<8x32xf32>
    %219 = arith.mulf %218, %217 : vector<8x32xf32>
    %cst_76 = arith.constant 5.000000e-01 : f32
    %220 = vector.broadcast %cst_76 : f32 to vector<8x32xf32>
    %221 = arith.addf %219, %220 : vector<8x32xf32>
    %222 = vector.extract_strided_slice %205 {offsets = [0, 64], sizes = [8, 32], strides = [1, 1]} : vector<8x128xf32> to vector<8x32xf32>
    %223 = math.tanh %222 : vector<8x32xf32>
    %224 = vector.extract_strided_slice %205 {offsets = [0, 96], sizes = [8, 32], strides = [1, 1]} : vector<8x128xf32> to vector<8x32xf32>
    %cst_77 = arith.constant 5.000000e-01 : f32
    %225 = vector.broadcast %cst_77 : f32 to vector<8x32xf32>
    %226 = arith.mulf %225, %224 : vector<8x32xf32>
    %227 = math.tanh %226 : vector<8x32xf32>
    %cst_78 = arith.constant 5.000000e-01 : f32
    %228 = vector.broadcast %cst_78 : f32 to vector<8x32xf32>
    %229 = arith.mulf %228, %227 : vector<8x32xf32>
    %cst_79 = arith.constant 5.000000e-01 : f32
    %230 = vector.broadcast %cst_79 : f32 to vector<8x32xf32>
    %231 = arith.addf %229, %230 : vector<8x32xf32>
    %232 = arith.mulf %221, %162 : vector<8x32xf32>
    %233 = arith.mulf %213, %223 : vector<8x32xf32>
    %234 = arith.addf %232, %233 : vector<8x32xf32>
    %235 = math.tanh %234 : vector<8x32xf32>
    %236 = arith.mulf %231, %235 : vector<8x32xf32>
    %237 = vector.extract_strided_slice %7 {offsets = [24, 0], sizes = [8, 128], strides = [1, 1]} : vector<64x128xf32> to vector<8x128xf32>
    %238 = arith.truncf %199 : vector<8x32xf32> to vector<8x32xbf16>
    %cst_80 = arith.constant dense<0.000000e+00> : vector<8x128xf32>
    %239 = tpu.matmul %238, %9, %cst_80 {dimension_numbers = #tpu.dot_dimension_numbers<[1], [0], [0], [1], [0, 0, 1, 1], [], []>} : vector<8x32xbf16>, vector<32x128xbf16>, vector<8x128xf32> -> vector<8x128xf32>
    %240 = arith.addf %237, %239 : vector<8x128xf32>
    %241 = vector.extract_strided_slice %240 {offsets = [0, 0], sizes = [8, 32], strides = [1, 1]} : vector<8x128xf32> to vector<8x32xf32>
    %cst_81 = arith.constant 5.000000e-01 : f32
    %242 = vector.broadcast %cst_81 : f32 to vector<8x32xf32>
    %243 = arith.mulf %242, %241 : vector<8x32xf32>
    %244 = math.tanh %243 : vector<8x32xf32>
    %cst_82 = arith.constant 5.000000e-01 : f32
    %245 = vector.broadcast %cst_82 : f32 to vector<8x32xf32>
    %246 = arith.mulf %245, %244 : vector<8x32xf32>
    %cst_83 = arith.constant 5.000000e-01 : f32
    %247 = vector.broadcast %cst_83 : f32 to vector<8x32xf32>
    %248 = arith.addf %246, %247 : vector<8x32xf32>
    %249 = vector.extract_strided_slice %240 {offsets = [0, 32], sizes = [8, 32], strides = [1, 1]} : vector<8x128xf32> to vector<8x32xf32>
    %cst_84 = arith.constant 5.000000e-01 : f32
    %250 = vector.broadcast %cst_84 : f32 to vector<8x32xf32>
    %251 = arith.mulf %250, %249 : vector<8x32xf32>
    %252 = math.tanh %251 : vector<8x32xf32>
    %cst_85 = arith.constant 5.000000e-01 : f32
    %253 = vector.broadcast %cst_85 : f32 to vector<8x32xf32>
    %254 = arith.mulf %253, %252 : vector<8x32xf32>
    %cst_86 = arith.constant 5.000000e-01 : f32
    %255 = vector.broadcast %cst_86 : f32 to vector<8x32xf32>
    %256 = arith.addf %254, %255 : vector<8x32xf32>
    %257 = vector.extract_strided_slice %240 {offsets = [0, 64], sizes = [8, 32], strides = [1, 1]} : vector<8x128xf32> to vector<8x32xf32>
    %258 = math.tanh %257 : vector<8x32xf32>
    %259 = vector.extract_strided_slice %240 {offsets = [0, 96], sizes = [8, 32], strides = [1, 1]} : vector<8x128xf32> to vector<8x32xf32>
    %cst_87 = arith.constant 5.000000e-01 : f32
    %260 = vector.broadcast %cst_87 : f32 to vector<8x32xf32>
    %261 = arith.mulf %260, %259 : vector<8x32xf32>
    %262 = math.tanh %261 : vector<8x32xf32>
    %cst_88 = arith.constant 5.000000e-01 : f32
    %263 = vector.broadcast %cst_88 : f32 to vector<8x32xf32>
    %264 = arith.mulf %263, %262 : vector<8x32xf32>
    %cst_89 = arith.constant 5.000000e-01 : f32
    %265 = vector.broadcast %cst_89 : f32 to vector<8x32xf32>
    %266 = arith.addf %264, %265 : vector<8x32xf32>
    %267 = arith.mulf %256, %197 : vector<8x32xf32>
    %268 = arith.mulf %248, %258 : vector<8x32xf32>
    %269 = arith.addf %267, %268 : vector<8x32xf32>
    %270 = math.tanh %269 : vector<8x32xf32>
    %271 = arith.mulf %266, %270 : vector<8x32xf32>
    %272 = arith.truncf %271 : vector<8x32xf32> to vector<8x32xbf16>
    %cst_90 = arith.constant dense<0.000000e+00> : vector<8x128xf32>
    %273 = tpu.matmul %272, %11, %cst_90 {dimension_numbers = #tpu.dot_dimension_numbers<[1], [0], [0], [1], [0, 0, 1, 1], [], []>} : vector<8x32xbf16>, vector<32x128xbf16>, vector<8x128xf32> -> vector<8x128xf32>
    %274 = arith.truncf %236 : vector<8x32xf32> to vector<8x32xbf16>
    %cst_91 = arith.constant dense<0.000000e+00> : vector<8x128xf32>
    %275 = tpu.matmul %274, %13, %cst_91 {dimension_numbers = #tpu.dot_dimension_numbers<[1], [0], [0], [1], [0, 0, 1, 1], [], []>} : vector<8x32xbf16>, vector<32x128xbf16>, vector<8x128xf32> -> vector<8x128xf32>
    %276 = arith.addf %273, %275 : vector<8x128xf32>
    %277 = arith.addf %276, %16 : vector<8x128xf32>
    %278 = vector.extract_strided_slice %277 {offsets = [0, 0], sizes = [8, 32], strides = [1, 1]} : vector<8x128xf32> to vector<8x32xf32>
    %cst_92 = arith.constant 5.000000e-01 : f32
    %279 = vector.broadcast %cst_92 : f32 to vector<8x32xf32>
    %280 = arith.mulf %279, %278 : vector<8x32xf32>
    %281 = math.tanh %280 : vector<8x32xf32>
    %cst_93 = arith.constant 5.000000e-01 : f32
    %282 = vector.broadcast %cst_93 : f32 to vector<8x32xf32>
    %283 = arith.mulf %282, %281 : vector<8x32xf32>
    %cst_94 = arith.constant 5.000000e-01 : f32
    %284 = vector.broadcast %cst_94 : f32 to vector<8x32xf32>
    %285 = arith.addf %283, %284 : vector<8x32xf32>
    %286 = vector.extract_strided_slice %277 {offsets = [0, 32], sizes = [8, 32], strides = [1, 1]} : vector<8x128xf32> to vector<8x32xf32>
    %cst_95 = arith.constant 5.000000e-01 : f32
    %287 = vector.broadcast %cst_95 : f32 to vector<8x32xf32>
    %288 = arith.mulf %287, %286 : vector<8x32xf32>
    %289 = math.tanh %288 : vector<8x32xf32>
    %cst_96 = arith.constant 5.000000e-01 : f32
    %290 = vector.broadcast %cst_96 : f32 to vector<8x32xf32>
    %291 = arith.mulf %290, %289 : vector<8x32xf32>
    %cst_97 = arith.constant 5.000000e-01 : f32
    %292 = vector.broadcast %cst_97 : f32 to vector<8x32xf32>
    %293 = arith.addf %291, %292 : vector<8x32xf32>
    %294 = vector.extract_strided_slice %277 {offsets = [0, 64], sizes = [8, 32], strides = [1, 1]} : vector<8x128xf32> to vector<8x32xf32>
    %295 = math.tanh %294 : vector<8x32xf32>
    %296 = vector.extract_strided_slice %277 {offsets = [0, 96], sizes = [8, 32], strides = [1, 1]} : vector<8x128xf32> to vector<8x32xf32>
    %cst_98 = arith.constant 5.000000e-01 : f32
    %297 = vector.broadcast %cst_98 : f32 to vector<8x32xf32>
    %298 = arith.mulf %297, %296 : vector<8x32xf32>
    %299 = math.tanh %298 : vector<8x32xf32>
    %cst_99 = arith.constant 5.000000e-01 : f32
    %300 = vector.broadcast %cst_99 : f32 to vector<8x32xf32>
    %301 = arith.mulf %300, %299 : vector<8x32xf32>
    %cst_100 = arith.constant 5.000000e-01 : f32
    %302 = vector.broadcast %cst_100 : f32 to vector<8x32xf32>
    %303 = arith.addf %301, %302 : vector<8x32xf32>
    %304 = arith.mulf %293, %234 : vector<8x32xf32>
    %305 = arith.mulf %285, %295 : vector<8x32xf32>
    %306 = arith.addf %304, %305 : vector<8x32xf32>
    %307 = math.tanh %306 : vector<8x32xf32>
    %308 = arith.mulf %303, %307 : vector<8x32xf32>
    %309 = vector.extract_strided_slice %7 {offsets = [32, 0], sizes = [8, 128], strides = [1, 1]} : vector<64x128xf32> to vector<8x128xf32>
    %310 = arith.truncf %271 : vector<8x32xf32> to vector<8x32xbf16>
    %cst_101 = arith.constant dense<0.000000e+00> : vector<8x128xf32>
    %311 = tpu.matmul %310, %9, %cst_101 {dimension_numbers = #tpu.dot_dimension_numbers<[1], [0], [0], [1], [0, 0, 1, 1], [], []>} : vector<8x32xbf16>, vector<32x128xbf16>, vector<8x128xf32> -> vector<8x128xf32>
    %312 = arith.addf %309, %311 : vector<8x128xf32>
    %313 = vector.extract_strided_slice %312 {offsets = [0, 0], sizes = [8, 32], strides = [1, 1]} : vector<8x128xf32> to vector<8x32xf32>
    %cst_102 = arith.constant 5.000000e-01 : f32
    %314 = vector.broadcast %cst_102 : f32 to vector<8x32xf32>
    %315 = arith.mulf %314, %313 : vector<8x32xf32>
    %316 = math.tanh %315 : vector<8x32xf32>
    %cst_103 = arith.constant 5.000000e-01 : f32
    %317 = vector.broadcast %cst_103 : f32 to vector<8x32xf32>
    %318 = arith.mulf %317, %316 : vector<8x32xf32>
    %cst_104 = arith.constant 5.000000e-01 : f32
    %319 = vector.broadcast %cst_104 : f32 to vector<8x32xf32>
    %320 = arith.addf %318, %319 : vector<8x32xf32>
    %321 = vector.extract_strided_slice %312 {offsets = [0, 32], sizes = [8, 32], strides = [1, 1]} : vector<8x128xf32> to vector<8x32xf32>
    %cst_105 = arith.constant 5.000000e-01 : f32
    %322 = vector.broadcast %cst_105 : f32 to vector<8x32xf32>
    %323 = arith.mulf %322, %321 : vector<8x32xf32>
    %324 = math.tanh %323 : vector<8x32xf32>
    %cst_106 = arith.constant 5.000000e-01 : f32
    %325 = vector.broadcast %cst_106 : f32 to vector<8x32xf32>
    %326 = arith.mulf %325, %324 : vector<8x32xf32>
    %cst_107 = arith.constant 5.000000e-01 : f32
    %327 = vector.broadcast %cst_107 : f32 to vector<8x32xf32>
    %328 = arith.addf %326, %327 : vector<8x32xf32>
    %329 = vector.extract_strided_slice %312 {offsets = [0, 64], sizes = [8, 32], strides = [1, 1]} : vector<8x128xf32> to vector<8x32xf32>
    %330 = math.tanh %329 : vector<8x32xf32>
    %331 = vector.extract_strided_slice %312 {offsets = [0, 96], sizes = [8, 32], strides = [1, 1]} : vector<8x128xf32> to vector<8x32xf32>
    %cst_108 = arith.constant 5.000000e-01 : f32
    %332 = vector.broadcast %cst_108 : f32 to vector<8x32xf32>
    %333 = arith.mulf %332, %331 : vector<8x32xf32>
    %334 = math.tanh %333 : vector<8x32xf32>
    %cst_109 = arith.constant 5.000000e-01 : f32
    %335 = vector.broadcast %cst_109 : f32 to vector<8x32xf32>
    %336 = arith.mulf %335, %334 : vector<8x32xf32>
    %cst_110 = arith.constant 5.000000e-01 : f32
    %337 = vector.broadcast %cst_110 : f32 to vector<8x32xf32>
    %338 = arith.addf %336, %337 : vector<8x32xf32>
    %339 = arith.mulf %328, %269 : vector<8x32xf32>
    %340 = arith.mulf %320, %330 : vector<8x32xf32>
    %341 = arith.addf %339, %340 : vector<8x32xf32>
    %342 = math.tanh %341 : vector<8x32xf32>
    %343 = arith.mulf %338, %342 : vector<8x32xf32>
    %344 = arith.truncf %343 : vector<8x32xf32> to vector<8x32xbf16>
    %cst_111 = arith.constant dense<0.000000e+00> : vector<8x128xf32>
    %345 = tpu.matmul %344, %11, %cst_111 {dimension_numbers = #tpu.dot_dimension_numbers<[1], [0], [0], [1], [0, 0, 1, 1], [], []>} : vector<8x32xbf16>, vector<32x128xbf16>, vector<8x128xf32> -> vector<8x128xf32>
    %346 = arith.truncf %308 : vector<8x32xf32> to vector<8x32xbf16>
    %cst_112 = arith.constant dense<0.000000e+00> : vector<8x128xf32>
    %347 = tpu.matmul %346, %13, %cst_112 {dimension_numbers = #tpu.dot_dimension_numbers<[1], [0], [0], [1], [0, 0, 1, 1], [], []>} : vector<8x32xbf16>, vector<32x128xbf16>, vector<8x128xf32> -> vector<8x128xf32>
    %348 = arith.addf %345, %347 : vector<8x128xf32>
    %349 = arith.addf %348, %16 : vector<8x128xf32>
    %350 = vector.extract_strided_slice %349 {offsets = [0, 0], sizes = [8, 32], strides = [1, 1]} : vector<8x128xf32> to vector<8x32xf32>
    %cst_113 = arith.constant 5.000000e-01 : f32
    %351 = vector.broadcast %cst_113 : f32 to vector<8x32xf32>
    %352 = arith.mulf %351, %350 : vector<8x32xf32>
    %353 = math.tanh %352 : vector<8x32xf32>
    %cst_114 = arith.constant 5.000000e-01 : f32
    %354 = vector.broadcast %cst_114 : f32 to vector<8x32xf32>
    %355 = arith.mulf %354, %353 : vector<8x32xf32>
    %cst_115 = arith.constant 5.000000e-01 : f32
    %356 = vector.broadcast %cst_115 : f32 to vector<8x32xf32>
    %357 = arith.addf %355, %356 : vector<8x32xf32>
    %358 = vector.extract_strided_slice %349 {offsets = [0, 32], sizes = [8, 32], strides = [1, 1]} : vector<8x128xf32> to vector<8x32xf32>
    %cst_116 = arith.constant 5.000000e-01 : f32
    %359 = vector.broadcast %cst_116 : f32 to vector<8x32xf32>
    %360 = arith.mulf %359, %358 : vector<8x32xf32>
    %361 = math.tanh %360 : vector<8x32xf32>
    %cst_117 = arith.constant 5.000000e-01 : f32
    %362 = vector.broadcast %cst_117 : f32 to vector<8x32xf32>
    %363 = arith.mulf %362, %361 : vector<8x32xf32>
    %cst_118 = arith.constant 5.000000e-01 : f32
    %364 = vector.broadcast %cst_118 : f32 to vector<8x32xf32>
    %365 = arith.addf %363, %364 : vector<8x32xf32>
    %366 = vector.extract_strided_slice %349 {offsets = [0, 64], sizes = [8, 32], strides = [1, 1]} : vector<8x128xf32> to vector<8x32xf32>
    %367 = math.tanh %366 : vector<8x32xf32>
    %368 = vector.extract_strided_slice %349 {offsets = [0, 96], sizes = [8, 32], strides = [1, 1]} : vector<8x128xf32> to vector<8x32xf32>
    %cst_119 = arith.constant 5.000000e-01 : f32
    %369 = vector.broadcast %cst_119 : f32 to vector<8x32xf32>
    %370 = arith.mulf %369, %368 : vector<8x32xf32>
    %371 = math.tanh %370 : vector<8x32xf32>
    %cst_120 = arith.constant 5.000000e-01 : f32
    %372 = vector.broadcast %cst_120 : f32 to vector<8x32xf32>
    %373 = arith.mulf %372, %371 : vector<8x32xf32>
    %cst_121 = arith.constant 5.000000e-01 : f32
    %374 = vector.broadcast %cst_121 : f32 to vector<8x32xf32>
    %375 = arith.addf %373, %374 : vector<8x32xf32>
    %376 = arith.mulf %365, %306 : vector<8x32xf32>
    %377 = arith.mulf %357, %367 : vector<8x32xf32>
    %378 = arith.addf %376, %377 : vector<8x32xf32>
    %379 = math.tanh %378 : vector<8x32xf32>
    %380 = arith.mulf %375, %379 : vector<8x32xf32>
    %381 = vector.extract_strided_slice %7 {offsets = [40, 0], sizes = [8, 128], strides = [1, 1]} : vector<64x128xf32> to vector<8x128xf32>
    %382 = arith.truncf %343 : vector<8x32xf32> to vector<8x32xbf16>
    %cst_122 = arith.constant dense<0.000000e+00> : vector<8x128xf32>
    %383 = tpu.matmul %382, %9, %cst_122 {dimension_numbers = #tpu.dot_dimension_numbers<[1], [0], [0], [1], [0, 0, 1, 1], [], []>} : vector<8x32xbf16>, vector<32x128xbf16>, vector<8x128xf32> -> vector<8x128xf32>
    %384 = arith.addf %381, %383 : vector<8x128xf32>
    %385 = vector.extract_strided_slice %384 {offsets = [0, 0], sizes = [8, 32], strides = [1, 1]} : vector<8x128xf32> to vector<8x32xf32>
    %cst_123 = arith.constant 5.000000e-01 : f32
    %386 = vector.broadcast %cst_123 : f32 to vector<8x32xf32>
    %387 = arith.mulf %386, %385 : vector<8x32xf32>
    %388 = math.tanh %387 : vector<8x32xf32>
    %cst_124 = arith.constant 5.000000e-01 : f32
    %389 = vector.broadcast %cst_124 : f32 to vector<8x32xf32>
    %390 = arith.mulf %389, %388 : vector<8x32xf32>
    %cst_125 = arith.constant 5.000000e-01 : f32
    %391 = vector.broadcast %cst_125 : f32 to vector<8x32xf32>
    %392 = arith.addf %390, %391 : vector<8x32xf32>
    %393 = vector.extract_strided_slice %384 {offsets = [0, 32], sizes = [8, 32], strides = [1, 1]} : vector<8x128xf32> to vector<8x32xf32>
    %cst_126 = arith.constant 5.000000e-01 : f32
    %394 = vector.broadcast %cst_126 : f32 to vector<8x32xf32>
    %395 = arith.mulf %394, %393 : vector<8x32xf32>
    %396 = math.tanh %395 : vector<8x32xf32>
    %cst_127 = arith.constant 5.000000e-01 : f32
    %397 = vector.broadcast %cst_127 : f32 to vector<8x32xf32>
    %398 = arith.mulf %397, %396 : vector<8x32xf32>
    %cst_128 = arith.constant 5.000000e-01 : f32
    %399 = vector.broadcast %cst_128 : f32 to vector<8x32xf32>
    %400 = arith.addf %398, %399 : vector<8x32xf32>
    %401 = vector.extract_strided_slice %384 {offsets = [0, 64], sizes = [8, 32], strides = [1, 1]} : vector<8x128xf32> to vector<8x32xf32>
    %402 = math.tanh %401 : vector<8x32xf32>
    %403 = vector.extract_strided_slice %384 {offsets = [0, 96], sizes = [8, 32], strides = [1, 1]} : vector<8x128xf32> to vector<8x32xf32>
    %cst_129 = arith.constant 5.000000e-01 : f32
    %404 = vector.broadcast %cst_129 : f32 to vector<8x32xf32>
    %405 = arith.mulf %404, %403 : vector<8x32xf32>
    %406 = math.tanh %405 : vector<8x32xf32>
    %cst_130 = arith.constant 5.000000e-01 : f32
    %407 = vector.broadcast %cst_130 : f32 to vector<8x32xf32>
    %408 = arith.mulf %407, %406 : vector<8x32xf32>
    %cst_131 = arith.constant 5.000000e-01 : f32
    %409 = vector.broadcast %cst_131 : f32 to vector<8x32xf32>
    %410 = arith.addf %408, %409 : vector<8x32xf32>
    %411 = arith.mulf %400, %341 : vector<8x32xf32>
    %412 = arith.mulf %392, %402 : vector<8x32xf32>
    %413 = arith.addf %411, %412 : vector<8x32xf32>
    %414 = math.tanh %413 : vector<8x32xf32>
    %415 = arith.mulf %410, %414 : vector<8x32xf32>
    %416 = arith.truncf %415 : vector<8x32xf32> to vector<8x32xbf16>
    %cst_132 = arith.constant dense<0.000000e+00> : vector<8x128xf32>
    %417 = tpu.matmul %416, %11, %cst_132 {dimension_numbers = #tpu.dot_dimension_numbers<[1], [0], [0], [1], [0, 0, 1, 1], [], []>} : vector<8x32xbf16>, vector<32x128xbf16>, vector<8x128xf32> -> vector<8x128xf32>
    %418 = arith.truncf %380 : vector<8x32xf32> to vector<8x32xbf16>
    %cst_133 = arith.constant dense<0.000000e+00> : vector<8x128xf32>
    %419 = tpu.matmul %418, %13, %cst_133 {dimension_numbers = #tpu.dot_dimension_numbers<[1], [0], [0], [1], [0, 0, 1, 1], [], []>} : vector<8x32xbf16>, vector<32x128xbf16>, vector<8x128xf32> -> vector<8x128xf32>
    %420 = arith.addf %417, %419 : vector<8x128xf32>
    %421 = arith.addf %420, %16 : vector<8x128xf32>
    %422 = vector.extract_strided_slice %421 {offsets = [0, 0], sizes = [8, 32], strides = [1, 1]} : vector<8x128xf32> to vector<8x32xf32>
    %cst_134 = arith.constant 5.000000e-01 : f32
    %423 = vector.broadcast %cst_134 : f32 to vector<8x32xf32>
    %424 = arith.mulf %423, %422 : vector<8x32xf32>
    %425 = math.tanh %424 : vector<8x32xf32>
    %cst_135 = arith.constant 5.000000e-01 : f32
    %426 = vector.broadcast %cst_135 : f32 to vector<8x32xf32>
    %427 = arith.mulf %426, %425 : vector<8x32xf32>
    %cst_136 = arith.constant 5.000000e-01 : f32
    %428 = vector.broadcast %cst_136 : f32 to vector<8x32xf32>
    %429 = arith.addf %427, %428 : vector<8x32xf32>
    %430 = vector.extract_strided_slice %421 {offsets = [0, 32], sizes = [8, 32], strides = [1, 1]} : vector<8x128xf32> to vector<8x32xf32>
    %cst_137 = arith.constant 5.000000e-01 : f32
    %431 = vector.broadcast %cst_137 : f32 to vector<8x32xf32>
    %432 = arith.mulf %431, %430 : vector<8x32xf32>
    %433 = math.tanh %432 : vector<8x32xf32>
    %cst_138 = arith.constant 5.000000e-01 : f32
    %434 = vector.broadcast %cst_138 : f32 to vector<8x32xf32>
    %435 = arith.mulf %434, %433 : vector<8x32xf32>
    %cst_139 = arith.constant 5.000000e-01 : f32
    %436 = vector.broadcast %cst_139 : f32 to vector<8x32xf32>
    %437 = arith.addf %435, %436 : vector<8x32xf32>
    %438 = vector.extract_strided_slice %421 {offsets = [0, 64], sizes = [8, 32], strides = [1, 1]} : vector<8x128xf32> to vector<8x32xf32>
    %439 = math.tanh %438 : vector<8x32xf32>
    %440 = vector.extract_strided_slice %421 {offsets = [0, 96], sizes = [8, 32], strides = [1, 1]} : vector<8x128xf32> to vector<8x32xf32>
    %cst_140 = arith.constant 5.000000e-01 : f32
    %441 = vector.broadcast %cst_140 : f32 to vector<8x32xf32>
    %442 = arith.mulf %441, %440 : vector<8x32xf32>
    %443 = math.tanh %442 : vector<8x32xf32>
    %cst_141 = arith.constant 5.000000e-01 : f32
    %444 = vector.broadcast %cst_141 : f32 to vector<8x32xf32>
    %445 = arith.mulf %444, %443 : vector<8x32xf32>
    %cst_142 = arith.constant 5.000000e-01 : f32
    %446 = vector.broadcast %cst_142 : f32 to vector<8x32xf32>
    %447 = arith.addf %445, %446 : vector<8x32xf32>
    %448 = arith.mulf %437, %378 : vector<8x32xf32>
    %449 = arith.mulf %429, %439 : vector<8x32xf32>
    %450 = arith.addf %448, %449 : vector<8x32xf32>
    %451 = math.tanh %450 : vector<8x32xf32>
    %452 = arith.mulf %447, %451 : vector<8x32xf32>
    %453 = vector.extract_strided_slice %7 {offsets = [48, 0], sizes = [8, 128], strides = [1, 1]} : vector<64x128xf32> to vector<8x128xf32>
    %454 = arith.truncf %415 : vector<8x32xf32> to vector<8x32xbf16>
    %cst_143 = arith.constant dense<0.000000e+00> : vector<8x128xf32>
    %455 = tpu.matmul %454, %9, %cst_143 {dimension_numbers = #tpu.dot_dimension_numbers<[1], [0], [0], [1], [0, 0, 1, 1], [], []>} : vector<8x32xbf16>, vector<32x128xbf16>, vector<8x128xf32> -> vector<8x128xf32>
    %456 = arith.addf %453, %455 : vector<8x128xf32>
    %457 = vector.extract_strided_slice %456 {offsets = [0, 0], sizes = [8, 32], strides = [1, 1]} : vector<8x128xf32> to vector<8x32xf32>
    %cst_144 = arith.constant 5.000000e-01 : f32
    %458 = vector.broadcast %cst_144 : f32 to vector<8x32xf32>
    %459 = arith.mulf %458, %457 : vector<8x32xf32>
    %460 = math.tanh %459 : vector<8x32xf32>
    %cst_145 = arith.constant 5.000000e-01 : f32
    %461 = vector.broadcast %cst_145 : f32 to vector<8x32xf32>
    %462 = arith.mulf %461, %460 : vector<8x32xf32>
    %cst_146 = arith.constant 5.000000e-01 : f32
    %463 = vector.broadcast %cst_146 : f32 to vector<8x32xf32>
    %464 = arith.addf %462, %463 : vector<8x32xf32>
    %465 = vector.extract_strided_slice %456 {offsets = [0, 32], sizes = [8, 32], strides = [1, 1]} : vector<8x128xf32> to vector<8x32xf32>
    %cst_147 = arith.constant 5.000000e-01 : f32
    %466 = vector.broadcast %cst_147 : f32 to vector<8x32xf32>
    %467 = arith.mulf %466, %465 : vector<8x32xf32>
    %468 = math.tanh %467 : vector<8x32xf32>
    %cst_148 = arith.constant 5.000000e-01 : f32
    %469 = vector.broadcast %cst_148 : f32 to vector<8x32xf32>
    %470 = arith.mulf %469, %468 : vector<8x32xf32>
    %cst_149 = arith.constant 5.000000e-01 : f32
    %471 = vector.broadcast %cst_149 : f32 to vector<8x32xf32>
    %472 = arith.addf %470, %471 : vector<8x32xf32>
    %473 = vector.extract_strided_slice %456 {offsets = [0, 64], sizes = [8, 32], strides = [1, 1]} : vector<8x128xf32> to vector<8x32xf32>
    %474 = math.tanh %473 : vector<8x32xf32>
    %475 = vector.extract_strided_slice %456 {offsets = [0, 96], sizes = [8, 32], strides = [1, 1]} : vector<8x128xf32> to vector<8x32xf32>
    %cst_150 = arith.constant 5.000000e-01 : f32
    %476 = vector.broadcast %cst_150 : f32 to vector<8x32xf32>
    %477 = arith.mulf %476, %475 : vector<8x32xf32>
    %478 = math.tanh %477 : vector<8x32xf32>
    %cst_151 = arith.constant 5.000000e-01 : f32
    %479 = vector.broadcast %cst_151 : f32 to vector<8x32xf32>
    %480 = arith.mulf %479, %478 : vector<8x32xf32>
    %cst_152 = arith.constant 5.000000e-01 : f32
    %481 = vector.broadcast %cst_152 : f32 to vector<8x32xf32>
    %482 = arith.addf %480, %481 : vector<8x32xf32>
    %483 = arith.mulf %472, %413 : vector<8x32xf32>
    %484 = arith.mulf %464, %474 : vector<8x32xf32>
    %485 = arith.addf %483, %484 : vector<8x32xf32>
    %486 = math.tanh %485 : vector<8x32xf32>
    %487 = arith.mulf %482, %486 : vector<8x32xf32>
    %488 = arith.truncf %487 : vector<8x32xf32> to vector<8x32xbf16>
    %cst_153 = arith.constant dense<0.000000e+00> : vector<8x128xf32>
    %489 = tpu.matmul %488, %11, %cst_153 {dimension_numbers = #tpu.dot_dimension_numbers<[1], [0], [0], [1], [0, 0, 1, 1], [], []>} : vector<8x32xbf16>, vector<32x128xbf16>, vector<8x128xf32> -> vector<8x128xf32>
    %490 = arith.truncf %452 : vector<8x32xf32> to vector<8x32xbf16>
    %cst_154 = arith.constant dense<0.000000e+00> : vector<8x128xf32>
    %491 = tpu.matmul %490, %13, %cst_154 {dimension_numbers = #tpu.dot_dimension_numbers<[1], [0], [0], [1], [0, 0, 1, 1], [], []>} : vector<8x32xbf16>, vector<32x128xbf16>, vector<8x128xf32> -> vector<8x128xf32>
    %492 = arith.addf %489, %491 : vector<8x128xf32>
    %493 = arith.addf %492, %16 : vector<8x128xf32>
    %494 = vector.extract_strided_slice %493 {offsets = [0, 0], sizes = [8, 32], strides = [1, 1]} : vector<8x128xf32> to vector<8x32xf32>
    %cst_155 = arith.constant 5.000000e-01 : f32
    %495 = vector.broadcast %cst_155 : f32 to vector<8x32xf32>
    %496 = arith.mulf %495, %494 : vector<8x32xf32>
    %497 = math.tanh %496 : vector<8x32xf32>
    %cst_156 = arith.constant 5.000000e-01 : f32
    %498 = vector.broadcast %cst_156 : f32 to vector<8x32xf32>
    %499 = arith.mulf %498, %497 : vector<8x32xf32>
    %cst_157 = arith.constant 5.000000e-01 : f32
    %500 = vector.broadcast %cst_157 : f32 to vector<8x32xf32>
    %501 = arith.addf %499, %500 : vector<8x32xf32>
    %502 = vector.extract_strided_slice %493 {offsets = [0, 32], sizes = [8, 32], strides = [1, 1]} : vector<8x128xf32> to vector<8x32xf32>
    %cst_158 = arith.constant 5.000000e-01 : f32
    %503 = vector.broadcast %cst_158 : f32 to vector<8x32xf32>
    %504 = arith.mulf %503, %502 : vector<8x32xf32>
    %505 = math.tanh %504 : vector<8x32xf32>
    %cst_159 = arith.constant 5.000000e-01 : f32
    %506 = vector.broadcast %cst_159 : f32 to vector<8x32xf32>
    %507 = arith.mulf %506, %505 : vector<8x32xf32>
    %cst_160 = arith.constant 5.000000e-01 : f32
    %508 = vector.broadcast %cst_160 : f32 to vector<8x32xf32>
    %509 = arith.addf %507, %508 : vector<8x32xf32>
    %510 = vector.extract_strided_slice %493 {offsets = [0, 64], sizes = [8, 32], strides = [1, 1]} : vector<8x128xf32> to vector<8x32xf32>
    %511 = math.tanh %510 : vector<8x32xf32>
    %512 = vector.extract_strided_slice %493 {offsets = [0, 96], sizes = [8, 32], strides = [1, 1]} : vector<8x128xf32> to vector<8x32xf32>
    %cst_161 = arith.constant 5.000000e-01 : f32
    %513 = vector.broadcast %cst_161 : f32 to vector<8x32xf32>
    %514 = arith.mulf %513, %512 : vector<8x32xf32>
    %515 = math.tanh %514 : vector<8x32xf32>
    %cst_162 = arith.constant 5.000000e-01 : f32
    %516 = vector.broadcast %cst_162 : f32 to vector<8x32xf32>
    %517 = arith.mulf %516, %515 : vector<8x32xf32>
    %cst_163 = arith.constant 5.000000e-01 : f32
    %518 = vector.broadcast %cst_163 : f32 to vector<8x32xf32>
    %519 = arith.addf %517, %518 : vector<8x32xf32>
    %520 = arith.mulf %509, %450 : vector<8x32xf32>
    %521 = arith.mulf %501, %511 : vector<8x32xf32>
    %522 = arith.addf %520, %521 : vector<8x32xf32>
    %523 = math.tanh %522 : vector<8x32xf32>
    %524 = arith.mulf %519, %523 : vector<8x32xf32>
    %525 = vector.extract_strided_slice %7 {offsets = [56, 0], sizes = [8, 128], strides = [1, 1]} : vector<64x128xf32> to vector<8x128xf32>
    %526 = arith.truncf %487 : vector<8x32xf32> to vector<8x32xbf16>
    %cst_164 = arith.constant dense<0.000000e+00> : vector<8x128xf32>
    %527 = tpu.matmul %526, %9, %cst_164 {dimension_numbers = #tpu.dot_dimension_numbers<[1], [0], [0], [1], [0, 0, 1, 1], [], []>} : vector<8x32xbf16>, vector<32x128xbf16>, vector<8x128xf32> -> vector<8x128xf32>
    %528 = arith.addf %525, %527 : vector<8x128xf32>
    %529 = vector.extract_strided_slice %528 {offsets = [0, 0], sizes = [8, 32], strides = [1, 1]} : vector<8x128xf32> to vector<8x32xf32>
    %cst_165 = arith.constant 5.000000e-01 : f32
    %530 = vector.broadcast %cst_165 : f32 to vector<8x32xf32>
    %531 = arith.mulf %530, %529 : vector<8x32xf32>
    %532 = math.tanh %531 : vector<8x32xf32>
    %cst_166 = arith.constant 5.000000e-01 : f32
    %533 = vector.broadcast %cst_166 : f32 to vector<8x32xf32>
    %534 = arith.mulf %533, %532 : vector<8x32xf32>
    %cst_167 = arith.constant 5.000000e-01 : f32
    %535 = vector.broadcast %cst_167 : f32 to vector<8x32xf32>
    %536 = arith.addf %534, %535 : vector<8x32xf32>
    %537 = vector.extract_strided_slice %528 {offsets = [0, 32], sizes = [8, 32], strides = [1, 1]} : vector<8x128xf32> to vector<8x32xf32>
    %cst_168 = arith.constant 5.000000e-01 : f32
    %538 = vector.broadcast %cst_168 : f32 to vector<8x32xf32>
    %539 = arith.mulf %538, %537 : vector<8x32xf32>
    %540 = math.tanh %539 : vector<8x32xf32>
    %cst_169 = arith.constant 5.000000e-01 : f32
    %541 = vector.broadcast %cst_169 : f32 to vector<8x32xf32>
    %542 = arith.mulf %541, %540 : vector<8x32xf32>
    %cst_170 = arith.constant 5.000000e-01 : f32
    %543 = vector.broadcast %cst_170 : f32 to vector<8x32xf32>
    %544 = arith.addf %542, %543 : vector<8x32xf32>
    %545 = vector.extract_strided_slice %528 {offsets = [0, 64], sizes = [8, 32], strides = [1, 1]} : vector<8x128xf32> to vector<8x32xf32>
    %546 = math.tanh %545 : vector<8x32xf32>
    %547 = vector.extract_strided_slice %528 {offsets = [0, 96], sizes = [8, 32], strides = [1, 1]} : vector<8x128xf32> to vector<8x32xf32>
    %cst_171 = arith.constant 5.000000e-01 : f32
    %548 = vector.broadcast %cst_171 : f32 to vector<8x32xf32>
    %549 = arith.mulf %548, %547 : vector<8x32xf32>
    %550 = math.tanh %549 : vector<8x32xf32>
    %cst_172 = arith.constant 5.000000e-01 : f32
    %551 = vector.broadcast %cst_172 : f32 to vector<8x32xf32>
    %552 = arith.mulf %551, %550 : vector<8x32xf32>
    %cst_173 = arith.constant 5.000000e-01 : f32
    %553 = vector.broadcast %cst_173 : f32 to vector<8x32xf32>
    %554 = arith.addf %552, %553 : vector<8x32xf32>
    %555 = arith.mulf %544, %485 : vector<8x32xf32>
    %556 = arith.mulf %536, %546 : vector<8x32xf32>
    %557 = arith.addf %555, %556 : vector<8x32xf32>
    %558 = math.tanh %557 : vector<8x32xf32>
    %559 = arith.mulf %554, %558 : vector<8x32xf32>
    %560 = arith.truncf %559 : vector<8x32xf32> to vector<8x32xbf16>
    %cst_174 = arith.constant dense<0.000000e+00> : vector<8x128xf32>
    %561 = tpu.matmul %560, %11, %cst_174 {dimension_numbers = #tpu.dot_dimension_numbers<[1], [0], [0], [1], [0, 0, 1, 1], [], []>} : vector<8x32xbf16>, vector<32x128xbf16>, vector<8x128xf32> -> vector<8x128xf32>
    %562 = arith.truncf %524 : vector<8x32xf32> to vector<8x32xbf16>
    %cst_175 = arith.constant dense<0.000000e+00> : vector<8x128xf32>
    %563 = tpu.matmul %562, %13, %cst_175 {dimension_numbers = #tpu.dot_dimension_numbers<[1], [0], [0], [1], [0, 0, 1, 1], [], []>} : vector<8x32xbf16>, vector<32x128xbf16>, vector<8x128xf32> -> vector<8x128xf32>
    %564 = arith.addf %561, %563 : vector<8x128xf32>
    %565 = arith.addf %564, %16 : vector<8x128xf32>
    %566 = vector.extract_strided_slice %565 {offsets = [0, 0], sizes = [8, 32], strides = [1, 1]} : vector<8x128xf32> to vector<8x32xf32>
    %cst_176 = arith.constant 5.000000e-01 : f32
    %567 = vector.broadcast %cst_176 : f32 to vector<8x32xf32>
    %568 = arith.mulf %567, %566 : vector<8x32xf32>
    %569 = math.tanh %568 : vector<8x32xf32>
    %cst_177 = arith.constant 5.000000e-01 : f32
    %570 = vector.broadcast %cst_177 : f32 to vector<8x32xf32>
    %571 = arith.mulf %570, %569 : vector<8x32xf32>
    %cst_178 = arith.constant 5.000000e-01 : f32
    %572 = vector.broadcast %cst_178 : f32 to vector<8x32xf32>
    %573 = arith.addf %571, %572 : vector<8x32xf32>
    %574 = vector.extract_strided_slice %565 {offsets = [0, 32], sizes = [8, 32], strides = [1, 1]} : vector<8x128xf32> to vector<8x32xf32>
    %cst_179 = arith.constant 5.000000e-01 : f32
    %575 = vector.broadcast %cst_179 : f32 to vector<8x32xf32>
    %576 = arith.mulf %575, %574 : vector<8x32xf32>
    %577 = math.tanh %576 : vector<8x32xf32>
    %cst_180 = arith.constant 5.000000e-01 : f32
    %578 = vector.broadcast %cst_180 : f32 to vector<8x32xf32>
    %579 = arith.mulf %578, %577 : vector<8x32xf32>
    %cst_181 = arith.constant 5.000000e-01 : f32
    %580 = vector.broadcast %cst_181 : f32 to vector<8x32xf32>
    %581 = arith.addf %579, %580 : vector<8x32xf32>
    %582 = vector.extract_strided_slice %565 {offsets = [0, 64], sizes = [8, 32], strides = [1, 1]} : vector<8x128xf32> to vector<8x32xf32>
    %583 = math.tanh %582 : vector<8x32xf32>
    %584 = vector.extract_strided_slice %565 {offsets = [0, 96], sizes = [8, 32], strides = [1, 1]} : vector<8x128xf32> to vector<8x32xf32>
    %cst_182 = arith.constant 5.000000e-01 : f32
    %585 = vector.broadcast %cst_182 : f32 to vector<8x32xf32>
    %586 = arith.mulf %585, %584 : vector<8x32xf32>
    %587 = math.tanh %586 : vector<8x32xf32>
    %cst_183 = arith.constant 5.000000e-01 : f32
    %588 = vector.broadcast %cst_183 : f32 to vector<8x32xf32>
    %589 = arith.mulf %588, %587 : vector<8x32xf32>
    %cst_184 = arith.constant 5.000000e-01 : f32
    %590 = vector.broadcast %cst_184 : f32 to vector<8x32xf32>
    %591 = arith.addf %589, %590 : vector<8x32xf32>
    %592 = arith.mulf %581, %522 : vector<8x32xf32>
    %593 = arith.mulf %573, %583 : vector<8x32xf32>
    %594 = arith.addf %592, %593 : vector<8x32xf32>
    %595 = math.tanh %594 : vector<8x32xf32>
    %596 = arith.mulf %591, %595 : vector<8x32xf32>
    %597 = arith.truncf %596 : vector<8x32xf32> to vector<8x32xbf16>
    %c0_185 = arith.constant 0 : index
    %c0_186 = arith.constant 0 : index
    %598 = vector.load %arg7[%c0_185, %c0_186] : memref<32x16xf32, #tpu.memory_space<vmem>>, vector<32x16xf32>
    %599 = arith.truncf %598 : vector<32x16xf32> to vector<32x16xbf16>
    %cst_187 = arith.constant dense<0.000000e+00> : vector<8x16xf32>
    %600 = tpu.matmul %597, %599, %cst_187 {dimension_numbers = #tpu.dot_dimension_numbers<[1], [0], [0], [1], [0, 0, 1, 1], [], []>} : vector<8x32xbf16>, vector<32x16xbf16>, vector<8x16xf32> -> vector<8x16xf32>
    %c0_188 = arith.constant 0 : index
    %c0_189 = arith.constant 0 : index
    %601 = vector.load %arg8[%c0_188, %c0_189] : memref<1x16xf32, #tpu.memory_space<vmem>>, vector<1x16xf32>
    %602 = vector.broadcast %601 : vector<1x16xf32> to vector<8x16xf32>
    %603 = arith.addf %600, %602 : vector<8x16xf32>
    %cst_190 = arith.constant 0.000000e+00 : f32
    %604 = vector.broadcast %cst_190 : f32 to vector<8x16xf32>
    %605 = arith.maximumf %603, %604 : vector<8x16xf32>
    %606 = arith.truncf %605 : vector<8x16xf32> to vector<8x16xbf16>
    %c0_191 = arith.constant 0 : index
    %c0_192 = arith.constant 0 : index
    %607 = vector.load %arg9[%c0_191, %c0_192] : memref<16x4xf32, #tpu.memory_space<vmem>>, vector<16x4xf32>
    %608 = arith.truncf %607 : vector<16x4xf32> to vector<16x4xbf16>
    %cst_193 = arith.constant dense<0.000000e+00> : vector<8x4xf32>
    %609 = tpu.matmul %606, %608, %cst_193 {dimension_numbers = #tpu.dot_dimension_numbers<[1], [0], [0], [1], [0, 0, 1, 1], [], []>} : vector<8x16xbf16>, vector<16x4xbf16>, vector<8x4xf32> -> vector<8x4xf32>
    %c0_194 = arith.constant 0 : index
    %c0_195 = arith.constant 0 : index
    %610 = vector.load %arg10[%c0_194, %c0_195] : memref<1x4xf32, #tpu.memory_space<vmem>>, vector<1x4xf32>
    %611 = vector.broadcast %610 : vector<1x4xf32> to vector<8x4xf32>
    %612 = arith.addf %609, %611 : vector<8x4xf32>
    %c0_196 = arith.constant 0 : index
    %c0_197 = arith.constant 0 : index
    %613 = vector.load %arg11[%c0_196, %c0_197] : memref<8x4xf32, #tpu.memory_space<vmem>>, vector<8x4xf32>
    tpu.vector_store %arg11[%c0_196, %c0_197], %612 {strides = array<i32>} : memref<8x4xf32, #tpu.memory_space<vmem>>, vector<8x4xf32>,
    return
  }
}

</mosaic_0001>

<llo_original>
// kernel: tpu_custom_call.1
$region0: #{tpu_custom_call.1}
  #allocation0 [shape = 'u32[]', space=smem, size = 0x4, offset = 0x4, fixed_abs, tag = 'smem constant byte address 0x4 - core index']
  #allocation1 [shape = 'u32[72,128]{1,0:T(1,128)}', space=vmem, size = 0x9000, scoped, tag = 'internal scratch']
  %s0 = inlined_call_operand.vmem [shape: f32[64,42], index: 0, kind: input, shape index: {}]
  %s1 = inlined_call_operand.vmem [shape: f32[42,128], index: 1, kind: input, shape index: {}]
  %s2 = inlined_call_operand.vmem [shape: f32[32,128], index: 2, kind: input, shape index: {}]
  %s3 = inlined_call_operand.vmem [shape: f32[1,128], index: 3, kind: input, shape index: {}]
  %s4 = inlined_call_operand.vmem [shape: f32[32,128], index: 4, kind: input, shape index: {}]
  %s5 = inlined_call_operand.hbm [shape: f32[32,128], index: 5, kind: input, shape index: {}]
  %s6 = inlined_call_operand.vmem [shape: f32[1,128], index: 6, kind: input, shape index: {}]
  %s7 = inlined_call_operand.vmem [shape: f32[32,16], index: 7, kind: input, shape index: {}]
  %s8 = inlined_call_operand.vmem [shape: f32[1,16], index: 8, kind: input, shape index: {}]
  %s9 = inlined_call_operand.vmem [shape: f32[16,4], index: 9, kind: input, shape index: {}]
  %s10 = inlined_call_operand.vmem [shape: f32[1,4], index: 10, kind: input, shape index: {}]
  %s11 = inlined_call_operand.vmem [shape: f32[8,4], index: 11, kind: output, shape index: {}]
  %s12 = sld [smem:[#allocation0]]
  $region58: #{tpu_custom_call.1} parent=0
    _
  %s14 = ssub.s32 1, %s12
  %s15 = scalar_select 0, %s14, %s12
  $region1: #{tpu_custom_call.1} parent=0
    #allocation2 [shape = 'u8[16384]{0}', space=vmem, size = 0x4000, scoped, tag = 'input window, operand 5, single buffered']
    #allocation3 [shape = 's32[1]{0}', space=sflag, size = 0x4, scoped, tag = 'scoped memory for tpu_custom_call.1']
    %16 = vsyncpa [#allocation3], 0
    // Predicated region
    $region2: #{tpu_custom_call.1} parent=1 // pred_check
      _
    $region3: #{tpu_custom_call.1} parent=1 // pred_check_branch
      %18 = sbr.rel (0) target = $region5
    $region4: #{tpu_custom_call.1} parent=1 // pred_region
      _
    $region5: #{tpu_custom_call.1} parent=1 // pred_fallthru
      _
    // Predicated region
    $region6: #{tpu_custom_call.1} parent=1 // pred_check
      _
    $region7: #{tpu_custom_call.1} parent=1 // pred_check_branch
      %20 = sbr.rel (0) target = $region9
    $region8: #{tpu_custom_call.1} parent=1 // pred_region
      _
    $region9: #{tpu_custom_call.1} parent=1 // pred_fallthru
      _
    // Predicated region
    $region10: #{tpu_custom_call.1} parent=1 // pred_check
      _
    $region11: #{tpu_custom_call.1} parent=1 // pred_check_branch
      %22 = sbr.rel (0) target = $region13
    $region12: #{tpu_custom_call.1} parent=1 // pred_region
      _
    $region13: #{tpu_custom_call.1} parent=1 // pred_fallthru
      _
    // Predicated region
    $region14: #{tpu_custom_call.1} parent=1 // pred_check
      _
    $region15: #{tpu_custom_call.1} parent=1 // pred_check_branch
      %24 = sbr.rel (0) target = $region17
    $region16: #{tpu_custom_call.1} parent=1 // pred_region
      _
    $region17: #{tpu_custom_call.1} parent=1 // pred_fallthru
      _
    // Predicated region
    $region18: #{tpu_custom_call.1} parent=1 // pred_check
      _
    $region19: #{tpu_custom_call.1} parent=1 // pred_check_branch
      %26 = sbr.rel (0) target = $region21
    $region20: #{tpu_custom_call.1} parent=1 // pred_region
      _
    $region21: #{tpu_custom_call.1} parent=1 // pred_fallthru
      _
    // Predicated region
    $region22: #{tpu_custom_call.1} parent=1 // pred_check
      _
    $region23: #{tpu_custom_call.1} parent=1 // pred_check_branch
      %28 = sbr.rel (0) target = $region25
    $region24: #{tpu_custom_call.1} parent=1 // pred_region
      %30 = vsyncadd [#allocation3], 0
      %s31 = sshll.u32 %s5, 4
      %s32 = int_to_ptr.hbm [resolvable:$true] %s31
      %s33 = sshll.u32 [#allocation2], 4
      %s34 = int_to_ptr.vmem [resolvable:$true] %s33
      %39 = dma.hbm_to_vmem [thread:$0]  %s32, 512, %s34, [#allocation3], 128, 128, 8
    $region25: #{tpu_custom_call.1} parent=1 // pred_fallthru
      _
    // Predicated region
    $region26: #{tpu_custom_call.1} parent=1 // pred_check
      _
    $region27: #{tpu_custom_call.1} parent=1 // pred_check_branch
      %41 = sbr.rel (0) target = $region29
    $region28: #{tpu_custom_call.1} parent=1 // pred_region
      _
    $region29: #{tpu_custom_call.1} parent=1 // pred_fallthru
      _
    // Predicated region
    $region30: #{tpu_custom_call.1} parent=1 // pred_check
      _
    $region31: #{tpu_custom_call.1} parent=1 // pred_check_branch
      %43 = sbr.rel (0) target = $region33
    $region32: #{tpu_custom_call.1} parent=1 // pred_region
      _
    $region33: #{tpu_custom_call.1} parent=1 // pred_fallthru
      _
    // Predicated region
    $region34: #{tpu_custom_call.1} parent=1 // pred_check
      _
    $region35: #{tpu_custom_call.1} parent=1 // pred_check_branch
      %45 = sbr.rel (0) target = $region37
    $region36: #{tpu_custom_call.1} parent=1 // pred_region
      _
    $region37: #{tpu_custom_call.1} parent=1 // pred_fallthru
      _
    // Predicated region
    $region38: #{tpu_custom_call.1} parent=1 // pred_check
      _
    $region39: #{tpu_custom_call.1} parent=1 // pred_check_branch
      %47 = sbr.rel (0) target = $region41
    $region40: #{tpu_custom_call.1} parent=1 // pred_region
      _
    $region41: #{tpu_custom_call.1} parent=1 // pred_fallthru
      _
    // Predicated region
    $region42: #{tpu_custom_call.1} parent=1 // pred_check
      _
    $region43: #{tpu_custom_call.1} parent=1 // pred_check_branch
      %49 = sbr.rel (0) target = $region45
    $region44: #{tpu_custom_call.1} parent=1 // pred_region
      _
    $region45: #{tpu_custom_call.1} parent=1 // pred_fallthru
      _
    // Predicated region
    $region46: #{tpu_custom_call.1} parent=1 // pred_check
      _
    $region47: #{tpu_custom_call.1} parent=1 // pred_check_branch
      %51 = sbr.rel (0) target = $region49
    $region48: #{tpu_custom_call.1} parent=1 // pred_region
      %53 = dma.done [#allocation3], 512
    $region49: #{tpu_custom_call.1} parent=1 // pred_fallthru
      _
    %v55 = vld [vmem:[%s0] sm:$0xff]
    %v56 = vld [vmem:[%s0 + $0x8] sm:$0xff]
    %v57 = vld [vmem:[%s0 + $0x10] sm:$0xff]
    %v58 = vld [vmem:[%s0 + $0x18] sm:$0xff]
    %v59 = vld [vmem:[%s0 + $0x20] sm:$0xff]
    %v60 = vld [vmem:[%s0 + $0x28] sm:$0xff]
    %v61 = vld [vmem:[%s0 + $0x30] sm:$0xff]
    %v62 = vld [vmem:[%s0 + $0x38] sm:$0xff]
    %v63 = vpack.c.bf16 %v56, %v55
    %v64 = vpack.c.bf16 %v58, %v57
    %v65 = vpack.c.bf16 %v60, %v59
    %v66 = vpack.c.bf16 %v62, %v61
    %v67 = vld [vmem:[%s1] sm:$0xff]
    %v68 = vld [vmem:[%s1 + $0x8] sm:$0xff]
    %v69 = vld [vmem:[%s1 + $0x10] sm:$0xff]
    %v70 = vld [vmem:[%s1 + $0x18] sm:$0xff]
    %v71 = vld [vmem:[%s1 + $0x20] sm:$0xff]
    %v72 = vld [vmem:[%s1 + $0x28] sm:$0x3]
    %v73 = vpack.c.bf16 %v68, %v67
    %v74 = vpack.c.bf16 %v70, %v69
    %v75 = vpack.c.bf16 %v72, %v71
    %v76 = vld [vmem:[%s3] sm:$0x1]
    %v78 = vperm.slane %v76, 0
    %vm80 = vcmask 343040
    %v82 = vsel %vm80, %v63, 0
    %v85 = vsel %vm80, %v64, 0
    %v88 = vsel %vm80, %v65, 0
    %v91 = vsel %vm80, %v66, 0
    %vm93 = vcmask 1044480
    %v95 = vsel %vm93, %v75, 0
    %97 = vmatpush.bf16.msra.mxu0 0
    %98 = vmatpush.bf16.msra.mxu0 0
    %99 = vmatpush.bf16.msra.mxu0 0
    %100 = vmatpush.bf16.msra.mxu0 0
    %101 = vmatpush.bf16.msra.mxu0 0
    %102 = vmatpush.bf16.msra.mxu0 %v95
    %103 = vmatpush.bf16.msra.mxu0 %v74
    %104 = vmatpush.bf16.msra.mxu0 %v73
    %105 = vmatmul.bf16.gmra.mxu0 %v82
    %v106 = vpop.f32.mrf.mxu0
    %v107 = vadd.f32 %v78, %v106
    %v108 = vpop.f32.mrf.mxu0
    %v109 = vadd.f32 %v78, %v108
    %110 = vmatmul.bf16.gmra.mxu0 %v85
    %v111 = vpop.f32.mrf.mxu0
    %v112 = vadd.f32 %v78, %v111
    %v113 = vpop.f32.mrf.mxu0
    %v114 = vadd.f32 %v78, %v113
    %115 = vmatmul.bf16.gmra.mxu0 %v88
    %v116 = vpop.f32.mrf.mxu0
    %v117 = vadd.f32 %v78, %v116
    %v118 = vpop.f32.mrf.mxu0
    %v119 = vadd.f32 %v78, %v118
    %120 = vmatmul.bf16.gmra.mxu0 %v91
    %v121 = vpop.f32.mrf.mxu0
    %v122 = vadd.f32 %v78, %v121
    %v123 = vpop.f32.mrf.mxu0
    %v124 = vadd.f32 %v78, %v123
    %125 = vdwg.mxu0
    %v126 = vld [vmem:[%s2] sm:$0xff]
    %v127 = vld [vmem:[%s2 + $0x8] sm:$0xff]
    %v128 = vld [vmem:[%s2 + $0x10] sm:$0xff]
    %v129 = vld [vmem:[%s2 + $0x18] sm:$0xff]
    %v130 = vpack.c.bf16 %v127, %v126
    %v131 = vpack.c.bf16 %v129, %v128
    %v132 = vld [vmem:[%s4] sm:$0xff]
    %v133 = vld [vmem:[%s4 + $0x8] sm:$0xff]
    %v134 = vld [vmem:[%s4 + $0x10] sm:$0xff]
    %v135 = vld [vmem:[%s4 + $0x18] sm:$0xff]
    %v136 = vpack.c.bf16 %v133, %v132
    %v137 = vpack.c.bf16 %v135, %v134
    %v138 = vld [vmem:[#allocation2] sm:$0xff]
    %v139 = vld [vmem:[#allocation2 + $0x8] sm:$0xff]
    %v140 = vld [vmem:[#allocation2 + $0x10] sm:$0xff]
    %v141 = vld [vmem:[#allocation2 + $0x18] sm:$0xff]
    %v142 = vpack.c.bf16 %v139, %v138
    %v143 = vpack.c.bf16 %v141, %v140
    %v144 = vld [vmem:[%s6] sm:$0x1]
    %v146 = vperm.slane %v144, 0
    %vm148 = vcmask 261120
    %v150 = vsel %vm148, 0, 0
    %152 = vmatpush.bf16.msra.mxu0 0
    %153 = vmatpush.bf16.msra.mxu0 0
    %154 = vmatpush.bf16.msra.mxu0 0
    %155 = vmatpush.bf16.msra.mxu0 0
    %156 = vmatpush.bf16.msra.mxu0 0
    %157 = vmatpush.bf16.msra.mxu0 0
    %158 = vmatpush.bf16.msra.mxu0 %v131
    %159 = vmatpush.bf16.msra.mxu0 %v130
    %160 = vmatmul.bf16.gmra.mxu0 %v150
    %v161 = vpop.f32.mrf.mxu0
    %v162 = vadd.f32 0.0, %v161
    %v163 = vpop.f32.mrf.mxu0
    %164 = vdwg.mxu0
    %v165 = vadd.f32 %v107, %v162
    %v166 = vmul.f32 %v165, 0.5
    %v167 = vtanh.pop %v166
    %v168 = vmul.f32 %v167, 0.5
    %v169 = vadd.f32 %v168, 0.5
    %v170 = vtanh.pop %v165
    %v171 = vmul.f32 %v169, 0.0
    %173 = vrot.lane.b32.xlu0 %v170, 64
    %v174 = vpop.permute.xlu0 %173
    %v176 = vmul.f32 %v169, %v174
    %178 = vrot.lane.b32.xlu0 %v176, 32
    %v179 = vpop.permute.xlu0 %178
    %v181 = vadd.f32 %v171, %v179
    %v182 = vtanh.pop %v181
    %184 = vrot.lane.b32.xlu0 %v182, 64
    %v185 = vpop.permute.xlu0 %184
    %v187 = vmul.f32 %v169, %v185
    %v188 = vpack.c.bf16 %v187, %v187
    %189 = vmatpush.bf16.msra.mxu0 0
    %190 = vmatpush.bf16.msra.mxu0 0
    %191 = vmatpush.bf16.msra.mxu0 0
    %192 = vmatpush.bf16.msra.mxu0 0
    %193 = vmatpush.bf16.msra.mxu0 0
    %194 = vmatpush.bf16.msra.mxu0 0
    %195 = vmatpush.bf16.msra.mxu0 %v143
    %196 = vmatpush.bf16.msra.mxu0 %v142
    %197 = vmatmul.bf16.gmra.mxu0 %v150
    %v198 = vpop.f32.mrf.mxu0
    %v199 = vadd.f32 0.0, %v198
    %v200 = vpop.f32.mrf.mxu0
    %201 = vdwg.mxu0
    %203 = vrot.lane.b32.xlu0 %v188, 32
    %v204 = vpop.permute.xlu0 %203
    %v206 = vsel %vm148, %v204, 0
    %208 = vmatpush.bf16.msra.mxu0 0
    %209 = vmatpush.bf16.msra.mxu0 0
    %210 = vmatpush.bf16.msra.mxu0 0
    %211 = vmatpush.bf16.msra.mxu0 0
    %212 = vmatpush.bf16.msra.mxu0 0
    %213 = vmatpush.bf16.msra.mxu0 0
    %214 = vmatpush.bf16.msra.mxu0 %v137
    %215 = vmatpush.bf16.msra.mxu0 %v136
    %216 = vmatmul.bf16.gmra.mxu0 %v206
    %v217 = vpop.f32.mrf.mxu0
    %v218 = vadd.f32 %v199, %v217
    %v219 = vpop.f32.mrf.mxu0
    %220 = vdwg.mxu0
    %v221 = vadd.f32 %v218, %v146
    %v222 = vmul.f32 %v221, 0.5
    %v223 = vtanh.pop %v222
    %v224 = vmul.f32 %v223, 0.5
    %v225 = vadd.f32 %v224, 0.5
    %v226 = vtanh.pop %v221
    %v227 = vmul.f32 %v225, 0.0
    %229 = vrot.lane.b32.xlu0 %v226, 64
    %v230 = vpop.permute.xlu0 %229
    %v232 = vmul.f32 %v225, %v230
    %234 = vrot.lane.b32.xlu0 %v232, 32
    %v235 = vpop.permute.xlu0 %234
    %v237 = vadd.f32 %v227, %v235
    %v238 = vtanh.pop %v237
    %240 = vrot.lane.b32.xlu0 %v238, 64
    %v241 = vpop.permute.xlu0 %240
    %v243 = vmul.f32 %v225, %v241
    %244 = vmatpush.bf16.msra.mxu0 0
    %245 = vmatpush.bf16.msra.mxu0 0
    %246 = vmatpush.bf16.msra.mxu0 0
    %247 = vmatpush.bf16.msra.mxu0 0
    %248 = vmatpush.bf16.msra.mxu0 0
    %249 = vmatpush.bf16.msra.mxu0 0
    %250 = vmatpush.bf16.msra.mxu0 %v131
    %251 = vmatpush.bf16.msra.mxu0 %v130
    %252 = vmatmul.bf16.gmra.mxu0 %v206
    %v253 = vpop.f32.mrf.mxu0
    %v254 = vadd.f32 0.0, %v253
    %v255 = vpop.f32.mrf.mxu0
    %256 = vdwg.mxu0
    %v257 = vadd.f32 %v109, %v254
    %v258 = vmul.f32 %v257, 0.5
    %v259 = vtanh.pop %v258
    %v260 = vmul.f32 %v259, 0.5
    %v261 = vadd.f32 %v260, 0.5
    %v262 = vtanh.pop %v257
    %v263 = vmul.f32 %v261, %v181
    %265 = vrot.lane.b32.xlu0 %v262, 64
    %v266 = vpop.permute.xlu0 %265
    %v268 = vmul.f32 %v261, %v266
    %270 = vrot.lane.b32.xlu0 %v268, 32
    %v271 = vpop.permute.xlu0 %270
    %v273 = vadd.f32 %v263, %v271
    %v274 = vtanh.pop %v273
    %276 = vrot.lane.b32.xlu0 %v274, 64
    %v277 = vpop.permute.xlu0 %276
    %v279 = vmul.f32 %v261, %v277
    %v280 = vpack.c.bf16 %v279, %v279
    %v281 = vpack.c.bf16 %v243, %v243
    %283 = vrot.lane.b32.xlu0 %v281, 32
    %v284 = vpop.permute.xlu0 %283
    %v286 = vsel %vm148, %v284, 0
    %288 = vmatpush.bf16.msra.mxu0 0
    %289 = vmatpush.bf16.msra.mxu0 0
    %290 = vmatpush.bf16.msra.mxu0 0
    %291 = vmatpush.bf16.msra.mxu0 0
    %292 = vmatpush.bf16.msra.mxu0 0
    %293 = vmatpush.bf16.msra.mxu0 0
    %294 = vmatpush.bf16.msra.mxu0 %v143
    %295 = vmatpush.bf16.msra.mxu0 %v142
    %296 = vmatmul.bf16.gmra.mxu0 %v286
    %v297 = vpop.f32.mrf.mxu0
    %v298 = vadd.f32 0.0, %v297
    %v299 = vpop.f32.mrf.mxu0
    %300 = vdwg.mxu0
    %302 = vrot.lane.b32.xlu0 %v280, 32
    %v303 = vpop.permute.xlu0 %302
    %v305 = vsel %vm148, %v303, 0
    %307 = vmatpush.bf16.msra.mxu0 0
    %308 = vmatpush.bf16.msra.mxu0 0
    %309 = vmatpush.bf16.msra.mxu0 0
    %310 = vmatpush.bf16.msra.mxu0 0
    %311 = vmatpush.bf16.msra.mxu0 0
    %312 = vmatpush.bf16.msra.mxu0 0
    %313 = vmatpush.bf16.msra.mxu0 %v137
    %314 = vmatpush.bf16.msra.mxu0 %v136
    %315 = vmatmul.bf16.gmra.mxu0 %v305
    %v316 = vpop.f32.mrf.mxu0
    %v317 = vadd.f32 %v298, %v316
    %v318 = vpop.f32.mrf.mxu0
    %319 = vdwg.mxu0
    %v320 = vadd.f32 %v317, %v146
    %v321 = vmul.f32 %v320, 0.5
    %v322 = vtanh.pop %v321
    %v323 = vmul.f32 %v322, 0.5
    %v324 = vadd.f32 %v323, 0.5
    %v325 = vtanh.pop %v320
    %v326 = vmul.f32 %v324, %v237
    %328 = vrot.lane.b32.xlu0 %v325, 64
    %v329 = vpop.permute.xlu0 %328
    %v331 = vmul.f32 %v324, %v329
    %333 = vrot.lane.b32.xlu0 %v331, 32
    %v334 = vpop.permute.xlu0 %333
    %v336 = vadd.f32 %v326, %v334
    %v337 = vtanh.pop %v336
    %339 = vrot.lane.b32.xlu0 %v337, 64
    %v340 = vpop.permute.xlu0 %339
    %v342 = vmul.f32 %v324, %v340
    %343 = vmatpush.bf16.msra.mxu0 0
    %344 = vmatpush.bf16.msra.mxu0 0
    %345 = vmatpush.bf16.msra.mxu0 0
    %346 = vmatpush.bf16.msra.mxu0 0
    %347 = vmatpush.bf16.msra.mxu0 0
    %348 = vmatpush.bf16.msra.mxu0 0
    %349 = vmatpush.bf16.msra.mxu0 %v131
    %350 = vmatpush.bf16.msra.mxu0 %v130
    %351 = vmatmul.bf16.gmra.mxu0 %v305
    %v352 = vpop.f32.mrf.mxu0
    %v353 = vadd.f32 0.0, %v352
    %v354 = vpop.f32.mrf.mxu0
    %355 = vdwg.mxu0
    %v356 = vadd.f32 %v112, %v353
    %v357 = vmul.f32 %v356, 0.5
    %v358 = vtanh.pop %v357
    %v359 = vmul.f32 %v358, 0.5
    %v360 = vadd.f32 %v359, 0.5
    %v361 = vtanh.pop %v356
    %v362 = vmul.f32 %v360, %v273
    %364 = vrot.lane.b32.xlu0 %v361, 64
    %v365 = vpop.permute.xlu0 %364
    %v367 = vmul.f32 %v360, %v365
    %369 = vrot.lane.b32.xlu0 %v367, 32
    %v370 = vpop.permute.xlu0 %369
    %v372 = vadd.f32 %v362, %v370
    %v373 = vtanh.pop %v372
    %375 = vrot.lane.b32.xlu0 %v373, 64
    %v376 = vpop.permute.xlu0 %375
    %v378 = vmul.f32 %v360, %v376
    %v379 = vpack.c.bf16 %v378, %v378
    %v380 = vpack.c.bf16 %v342, %v342
    %382 = vrot.lane.b32.xlu0 %v380, 32
    %v383 = vpop.permute.xlu0 %382
    %v385 = vsel %vm148, %v383, 0
    %387 = vmatpush.bf16.msra.mxu0 0
    %388 = vmatpush.bf16.msra.mxu0 0
    %389 = vmatpush.bf16.msra.mxu0 0
    %390 = vmatpush.bf16.msra.mxu0 0
    %391 = vmatpush.bf16.msra.mxu0 0
    %392 = vmatpush.bf16.msra.mxu0 0
    %393 = vmatpush.bf16.msra.mxu0 %v143
    %394 = vmatpush.bf16.msra.mxu0 %v142
    %395 = vmatmul.bf16.gmra.mxu0 %v385
    %v396 = vpop.f32.mrf.mxu0
    %v397 = vadd.f32 0.0, %v396
    %v398 = vpop.f32.mrf.mxu0
    %399 = vdwg.mxu0
    %401 = vrot.lane.b32.xlu0 %v379, 32
    %v402 = vpop.permute.xlu0 %401
    %v404 = vsel %vm148, %v402, 0
    %406 = vmatpush.bf16.msra.mxu0 0
    %407 = vmatpush.bf16.msra.mxu0 0
    %408 = vmatpush.bf16.msra.mxu0 0
    %409 = vmatpush.bf16.msra.mxu0 0
    %410 = vmatpush.bf16.msra.mxu0 0
    %411 = vmatpush.bf16.msra.mxu0 0
    %412 = vmatpush.bf16.msra.mxu0 %v137
    %413 = vmatpush.bf16.msra.mxu0 %v136
    %414 = vmatmul.bf16.gmra.mxu0 %v404
    %v415 = vpop.f32.mrf.mxu0
    %v416 = vadd.f32 %v397, %v415
    %v417 = vpop.f32.mrf.mxu0
    %418 = vdwg.mxu0
    %v419 = vadd.f32 %v416, %v146
    %v420 = vmul.f32 %v419, 0.5
    %v421 = vtanh.pop %v420
    %v422 = vmul.f32 %v421, 0.5
    %v423 = vadd.f32 %v422, 0.5
    %v424 = vtanh.pop %v419
    %v425 = vmul.f32 %v423, %v336
    %427 = vrot.lane.b32.xlu0 %v424, 64
    %v428 = vpop.permute.xlu0 %427
    %v430 = vmul.f32 %v423, %v428
    %432 = vrot.lane.b32.xlu0 %v430, 32
    %v433 = vpop.permute.xlu0 %432
    %v435 = vadd.f32 %v425, %v433
    %v436 = vtanh.pop %v435
    %438 = vrot.lane.b32.xlu0 %v436, 64
    %v439 = vpop.permute.xlu0 %438
    %v441 = vmul.f32 %v423, %v439
    %442 = vmatpush.bf16.msra.mxu0 0
    %443 = vmatpush.bf16.msra.mxu0 0
    %444 = vmatpush.bf16.msra.mxu0 0
    %445 = vmatpush.bf16.msra.mxu0 0
    %446 = vmatpush.bf16.msra.mxu0 0
    %447 = vmatpush.bf16.msra.mxu0 0
    %448 = vmatpush.bf16.msra.mxu0 %v131
    %449 = vmatpush.bf16.msra.mxu0 %v130
    %450 = vmatmul.bf16.gmra.mxu0 %v404
    %v451 = vpop.f32.mrf.mxu0
    %v452 = vadd.f32 0.0, %v451
    %v453 = vpop.f32.mrf.mxu0
    %454 = vdwg.mxu0
    %v455 = vadd.f32 %v114, %v452
    %v456 = vmul.f32 %v455, 0.5
    %v457 = vtanh.pop %v456
    %v458 = vmul.f32 %v457, 0.5
    %v459 = vadd.f32 %v458, 0.5
    %v460 = vtanh.pop %v455
    %v461 = vmul.f32 %v459, %v372
    %463 = vrot.lane.b32.xlu0 %v460, 64
    %v464 = vpop.permute.xlu0 %463
    %v466 = vmul.f32 %v459, %v464
    %468 = vrot.lane.b32.xlu0 %v466, 32
    %v469 = vpop.permute.xlu0 %468
    %v471 = vadd.f32 %v461, %v469
    %v472 = vtanh.pop %v471
    %474 = vrot.lane.b32.xlu0 %v472, 64
    %v475 = vpop.permute.xlu0 %474
    %v477 = vmul.f32 %v459, %v475
    %v478 = vpack.c.bf16 %v477, %v477
    %v479 = vpack.c.bf16 %v441, %v441
    %481 = vrot.lane.b32.xlu0 %v479, 32
    %v482 = vpop.permute.xlu0 %481
    %v484 = vsel %vm148, %v482, 0
    %486 = vmatpush.bf16.msra.mxu0 0
    %487 = vmatpush.bf16.msra.mxu0 0
    %488 = vmatpush.bf16.msra.mxu0 0
    %489 = vmatpush.bf16.msra.mxu0 0
    %490 = vmatpush.bf16.msra.mxu0 0
    %491 = vmatpush.bf16.msra.mxu0 0
    %492 = vmatpush.bf16.msra.mxu0 %v143
    %493 = vmatpush.bf16.msra.mxu0 %v142
    %494 = vmatmul.bf16.gmra.mxu0 %v484
    %v495 = vpop.f32.mrf.mxu0
    %v496 = vadd.f32 0.0, %v495
    %v497 = vpop.f32.mrf.mxu0
    %498 = vdwg.mxu0
    %500 = vrot.lane.b32.xlu0 %v478, 32
    %v501 = vpop.permute.xlu0 %500
    %v503 = vsel %vm148, %v501, 0
    %505 = vmatpush.bf16.msra.mxu0 0
    %506 = vmatpush.bf16.msra.mxu0 0
    %507 = vmatpush.bf16.msra.mxu0 0
    %508 = vmatpush.bf16.msra.mxu0 0
    %509 = vmatpush.bf16.msra.mxu0 0
    %510 = vmatpush.bf16.msra.mxu0 0
    %511 = vmatpush.bf16.msra.mxu0 %v137
    %512 = vmatpush.bf16.msra.mxu0 %v136
    %513 = vmatmul.bf16.gmra.mxu0 %v503
    %v514 = vpop.f32.mrf.mxu0
    %v515 = vadd.f32 %v496, %v514
    %v516 = vpop.f32.mrf.mxu0
    %517 = vdwg.mxu0
    %v518 = vadd.f32 %v515, %v146
    %v519 = vmul.f32 %v518, 0.5
    %v520 = vtanh.pop %v519
    %v521 = vmul.f32 %v520, 0.5
    %v522 = vadd.f32 %v521, 0.5
    %v523 = vtanh.pop %v518
    %v524 = vmul.f32 %v522, %v435
    %526 = vrot.lane.b32.xlu0 %v523, 64
    %v527 = vpop.permute.xlu0 %526
    %v529 = vmul.f32 %v522, %v527
    %531 = vrot.lane.b32.xlu0 %v529, 32
    %v532 = vpop.permute.xlu0 %531
    %v534 = vadd.f32 %v524, %v532
    %v535 = vtanh.pop %v534
    %537 = vrot.lane.b32.xlu0 %v535, 64
    %v538 = vpop.permute.xlu0 %537
    %v540 = vmul.f32 %v522, %v538
    %541 = vmatpush.bf16.msra.mxu0 0
    %542 = vmatpush.bf16.msra.mxu0 0
    %543 = vmatpush.bf16.msra.mxu0 0
    %544 = vmatpush.bf16.msra.mxu0 0
    %545 = vmatpush.bf16.msra.mxu0 0
    %546 = vmatpush.bf16.msra.mxu0 0
    %547 = vmatpush.bf16.msra.mxu0 %v131
    %548 = vmatpush.bf16.msra.mxu0 %v130
    %549 = vmatmul.bf16.gmra.mxu0 %v503
    %v550 = vpop.f32.mrf.mxu0
    %v551 = vadd.f32 0.0, %v550
    %v552 = vpop.f32.mrf.mxu0
    %553 = vdwg.mxu0
    %v554 = vadd.f32 %v117, %v551
    %v555 = vmul.f32 %v554, 0.5
    %v556 = vtanh.pop %v555
    %v557 = vmul.f32 %v556, 0.5
    %v558 = vadd.f32 %v557, 0.5
    %v559 = vtanh.pop %v554
    %v560 = vmul.f32 %v558, %v471
    %562 = vrot.lane.b32.xlu0 %v559, 64
    %v563 = vpop.permute.xlu0 %562
    %v565 = vmul.f32 %v558, %v563
    %567 = vrot.lane.b32.xlu0 %v565, 32
    %v568 = vpop.permute.xlu0 %567
    %v570 = vadd.f32 %v560, %v568
    %v571 = vtanh.pop %v570
    %573 = vrot.lane.b32.xlu0 %v571, 64
    %v574 = vpop.permute.xlu0 %573
    %v576 = vmul.f32 %v558, %v574
    %v577 = vpack.c.bf16 %v576, %v576
    %v578 = vpack.c.bf16 %v540, %v540
    %580 = vrot.lane.b32.xlu0 %v578, 32
    %v581 = vpop.permute.xlu0 %580
    %v583 = vsel %vm148, %v581, 0
    %585 = vmatpush.bf16.msra.mxu0 0
    %586 = vmatpush.bf16.msra.mxu0 0
    %587 = vmatpush.bf16.msra.mxu0 0
    %588 = vmatpush.bf16.msra.mxu0 0
    %589 = vmatpush.bf16.msra.mxu0 0
    %590 = vmatpush.bf16.msra.mxu0 0
    %591 = vmatpush.bf16.msra.mxu0 %v143
    %592 = vmatpush.bf16.msra.mxu0 %v142
    %593 = vmatmul.bf16.gmra.mxu0 %v583
    %v594 = vpop.f32.mrf.mxu0
    %v595 = vadd.f32 0.0, %v594
    %v596 = vpop.f32.mrf.mxu0
    %597 = vdwg.mxu0
    %599 = vrot.lane.b32.xlu0 %v577, 32
    %v600 = vpop.permute.xlu0 %599
    %v602 = vsel %vm148, %v600, 0
    %604 = vmatpush.bf16.msra.mxu0 0
    %605 = vmatpush.bf16.msra.mxu0 0
    %606 = vmatpush.bf16.msra.mxu0 0
    %607 = vmatpush.bf16.msra.mxu0 0
    %608 = vmatpush.bf16.msra.mxu0 0
    %609 = vmatpush.bf16.msra.mxu0 0
    %610 = vmatpush.bf16.msra.mxu0 %v137
    %611 = vmatpush.bf16.msra.mxu0 %v136
    %612 = vmatmul.bf16.gmra.mxu0 %v602
    %v613 = vpop.f32.mrf.mxu0
    %v614 = vadd.f32 %v595, %v613
    %v615 = vpop.f32.mrf.mxu0
    %616 = vdwg.mxu0
    %v617 = vadd.f32 %v614, %v146
    %v618 = vmul.f32 %v617, 0.5
    %v619 = vtanh.pop %v618
    %v620 = vmul.f32 %v619, 0.5
    %v621 = vadd.f32 %v620, 0.5
    %v622 = vtanh.pop %v617
    %v623 = vmul.f32 %v621, %v534
    %625 = vrot.lane.b32.xlu0 %v622, 64
    %v626 = vpop.permute.xlu0 %625
    %v628 = vmul.f32 %v621, %v626
    %630 = vrot.lane.b32.xlu0 %v628, 32
    %v631 = vpop.permute.xlu0 %630
    %v633 = vadd.f32 %v623, %v631
    %v634 = vtanh.pop %v633
    %636 = vrot.lane.b32.xlu0 %v634, 64
    %v637 = vpop.permute.xlu0 %636
    %v639 = vmul.f32 %v621, %v637
    %640 = vmatpush.bf16.msra.mxu0 0
    %641 = vmatpush.bf16.msra.mxu0 0
    %642 = vmatpush.bf16.msra.mxu0 0
    %643 = vmatpush.bf16.msra.mxu0 0
    %644 = vmatpush.bf16.msra.mxu0 0
    %645 = vmatpush.bf16.msra.mxu0 0
    %646 = vmatpush.bf16.msra.mxu0 %v131
    %647 = vmatpush.bf16.msra.mxu0 %v130
    %648 = vmatmul.bf16.gmra.mxu0 %v602
    %v649 = vpop.f32.mrf.mxu0
    %v650 = vadd.f32 0.0, %v649
    %v651 = vpop.f32.mrf.mxu0
    %652 = vdwg.mxu0
    %v653 = vadd.f32 %v119, %v650
    %v654 = vmul.f32 %v653, 0.5
    %v655 = vtanh.pop %v654
    %v656 = vmul.f32 %v655, 0.5
    %v657 = vadd.f32 %v656, 0.5
    %v658 = vtanh.pop %v653
    %v659 = vmul.f32 %v657, %v570
    %661 = vrot.lane.b32.xlu0 %v658, 64
    %v662 = vpop.permute.xlu0 %661
    %v664 = vmul.f32 %v657, %v662
    %666 = vrot.lane.b32.xlu0 %v664, 32
    %v667 = vpop.permute.xlu0 %666
    %v669 = vadd.f32 %v659, %v667
    %v670 = vtanh.pop %v669
    %672 = vrot.lane.b32.xlu0 %v670, 64
    %v673 = vpop.permute.xlu0 %672
    %v675 = vmul.f32 %v657, %v673
    %v676 = vpack.c.bf16 %v675, %v675
    %v677 = vpack.c.bf16 %v639, %v639
    %679 = vrot.lane.b32.xlu0 %v677, 32
    %v680 = vpop.permute.xlu0 %679
    %v682 = vsel %vm148, %v680, 0
    %684 = vmatpush.bf16.msra.mxu0 0
    %685 = vmatpush.bf16.msra.mxu0 0
    %686 = vmatpush.bf16.msra.mxu0 0
    %687 = vmatpush.bf16.msra.mxu0 0
    %688 = vmatpush.bf16.msra.mxu0 0
    %689 = vmatpush.bf16.msra.mxu0 0
    %690 = vmatpush.bf16.msra.mxu0 %v143
    %691 = vmatpush.bf16.msra.mxu0 %v142
    %692 = vmatmul.bf16.gmra.mxu0 %v682
    %v693 = vpop.f32.mrf.mxu0
    %v694 = vadd.f32 0.0, %v693
    %v695 = vpop.f32.mrf.mxu0
    %696 = vdwg.mxu0
    %698 = vrot.lane.b32.xlu0 %v676, 32
    %v699 = vpop.permute.xlu0 %698
    %v701 = vsel %vm148, %v699, 0
    %703 = vmatpush.bf16.msra.mxu0 0
    %704 = vmatpush.bf16.msra.mxu0 0
    %705 = vmatpush.bf16.msra.mxu0 0
    %706 = vmatpush.bf16.msra.mxu0 0
    %707 = vmatpush.bf16.msra.mxu0 0
    %708 = vmatpush.bf16.msra.mxu0 0
    %709 = vmatpush.bf16.msra.mxu0 %v137
    %710 = vmatpush.bf16.msra.mxu0 %v136
    %711 = vmatmul.bf16.gmra.mxu0 %v701
    %v712 = vpop.f32.mrf.mxu0
    %v713 = vadd.f32 %v694, %v712
    %v714 = vpop.f32.mrf.mxu0
    %715 = vdwg.mxu0
    %v716 = vadd.f32 %v713, %v146
    %v717 = vmul.f32 %v716, 0.5
    %v718 = vtanh.pop %v717
    %v719 = vmul.f32 %v718, 0.5
    %v720 = vadd.f32 %v719, 0.5
    %v721 = vtanh.pop %v716
    %v722 = vmul.f32 %v720, %v633
    %724 = vrot.lane.b32.xlu0 %v721, 64
    %v725 = vpop.permute.xlu0 %724
    %v727 = vmul.f32 %v720, %v725
    %729 = vrot.lane.b32.xlu0 %v727, 32
    %v730 = vpop.permute.xlu0 %729
    %v732 = vadd.f32 %v722, %v730
    %v733 = vtanh.pop %v732
    %735 = vrot.lane.b32.xlu0 %v733, 64
    %v736 = vpop.permute.xlu0 %735
    %v738 = vmul.f32 %v720, %v736
    %739 = vmatpush.bf16.msra.mxu0 0
    %740 = vmatpush.bf16.msra.mxu0 0
    %741 = vmatpush.bf16.msra.mxu0 0
    %742 = vmatpush.bf16.msra.mxu0 0
    %743 = vmatpush.bf16.msra.mxu0 0
    %744 = vmatpush.bf16.msra.mxu0 0
    %745 = vmatpush.bf16.msra.mxu0 %v131
    %746 = vmatpush.bf16.msra.mxu0 %v130
    %747 = vmatmul.bf16.gmra.mxu0 %v701
    %v748 = vpop.f32.mrf.mxu0
    %v749 = vadd.f32 0.0, %v748
    %v750 = vpop.f32.mrf.mxu0
    %751 = vdwg.mxu0
    %v752 = vadd.f32 %v122, %v749
    %v753 = vmul.f32 %v752, 0.5
    %v754 = vtanh.pop %v753
    %v755 = vmul.f32 %v754, 0.5
    %v756 = vadd.f32 %v755, 0.5
    %v757 = vtanh.pop %v752
    %v758 = vmul.f32 %v756, %v669
    %760 = vrot.lane.b32.xlu0 %v757, 64
    %v761 = vpop.permute.xlu0 %760
    %v763 = vmul.f32 %v756, %v761
    %765 = vrot.lane.b32.xlu0 %v763, 32
    %v766 = vpop.permute.xlu0 %765
    %v768 = vadd.f32 %v758, %v766
    %v769 = vtanh.pop %v768
    %771 = vrot.lane.b32.xlu0 %v769, 64
    %v772 = vpop.permute.xlu0 %771
    %v774 = vmul.f32 %v756, %v772
    %v775 = vpack.c.bf16 %v774, %v774
    %v776 = vpack.c.bf16 %v738, %v738
    %778 = vrot.lane.b32.xlu0 %v776, 32
    %v779 = vpop.permute.xlu0 %778
    %v781 = vsel %vm148, %v779, 0
    %783 = vmatpush.bf16.msra.mxu0 0
    %784 = vmatpush.bf16.msra.mxu0 0
    %785 = vmatpush.bf16.msra.mxu0 0
    %786 = vmatpush.bf16.msra.mxu0 0
    %787 = vmatpush.bf16.msra.mxu0 0
    %788 = vmatpush.bf16.msra.mxu0 0
    %789 = vmatpush.bf16.msra.mxu0 %v143
    %790 = vmatpush.bf16.msra.mxu0 %v142
    %791 = vmatmul.bf16.gmra.mxu0 %v781
    %v792 = vpop.f32.mrf.mxu0
    %v793 = vadd.f32 0.0, %v792
    %v794 = vpop.f32.mrf.mxu0
    %795 = vdwg.mxu0
    %797 = vrot.lane.b32.xlu0 %v775, 32
    %v798 = vpop.permute.xlu0 %797
    %v800 = vsel %vm148, %v798, 0
    %802 = vmatpush.bf16.msra.mxu0 0
    %803 = vmatpush.bf16.msra.mxu0 0
    %804 = vmatpush.bf16.msra.mxu0 0
    %805 = vmatpush.bf16.msra.mxu0 0
    %806 = vmatpush.bf16.msra.mxu0 0
    %807 = vmatpush.bf16.msra.mxu0 0
    %808 = vmatpush.bf16.msra.mxu0 %v137
    %809 = vmatpush.bf16.msra.mxu0 %v136
    %810 = vmatmul.bf16.gmra.mxu0 %v800
    %v811 = vpop.f32.mrf.mxu0
    %v812 = vadd.f32 %v793, %v811
    %v813 = vpop.f32.mrf.mxu0
    %814 = vdwg.mxu0
    %v815 = vadd.f32 %v812, %v146
    %v816 = vmul.f32 %v815, 0.5
    %v817 = vtanh.pop %v816
    %v818 = vmul.f32 %v817, 0.5
    %v819 = vadd.f32 %v818, 0.5
    %v820 = vtanh.pop %v815
    %v821 = vmul.f32 %v819, %v732
    %823 = vrot.lane.b32.xlu0 %v820, 64
    %v824 = vpop.permute.xlu0 %823
    %v826 = vmul.f32 %v819, %v824
    %828 = vrot.lane.b32.xlu0 %v826, 32
    %v829 = vpop.permute.xlu0 %828
    %v831 = vadd.f32 %v821, %v829
    %v832 = vtanh.pop %v831
    %834 = vrot.lane.b32.xlu0 %v832, 64
    %v835 = vpop.permute.xlu0 %834
    %v837 = vmul.f32 %v819, %v835
    %838 = vmatpush.bf16.msra.mxu0 0
    %839 = vmatpush.bf16.msra.mxu0 0
    %840 = vmatpush.bf16.msra.mxu0 0
    %841 = vmatpush.bf16.msra.mxu0 0
    %842 = vmatpush.bf16.msra.mxu0 0
    %843 = vmatpush.bf16.msra.mxu0 0
    %844 = vmatpush.bf16.msra.mxu0 %v131
    %845 = vmatpush.bf16.msra.mxu0 %v130
    %846 = vmatmul.bf16.gmra.mxu0 %v800
    %v847 = vpop.f32.mrf.mxu0
    %v848 = vadd.f32 0.0, %v847
    %v849 = vpop.f32.mrf.mxu0
    %850 = vdwg.mxu0
    %v851 = vadd.f32 %v124, %v848
    %v852 = vmul.f32 %v851, 0.5
    %v853 = vtanh.pop %v852
    %v854 = vmul.f32 %v853, 0.5
    %v855 = vadd.f32 %v854, 0.5
    %v856 = vtanh.pop %v851
    %v857 = vmul.f32 %v855, %v768
    %859 = vrot.lane.b32.xlu0 %v856, 64
    %v860 = vpop.permute.xlu0 %859
    %v862 = vmul.f32 %v855, %v860
    %864 = vrot.lane.b32.xlu0 %v862, 32
    %v865 = vpop.permute.xlu0 %864
    %v867 = vadd.f32 %v857, %v865
    %v868 = vtanh.pop %v867
    %870 = vrot.lane.b32.xlu0 %v868, 64
    %v871 = vpop.permute.xlu0 %870
    %v873 = vmul.f32 %v855, %v871
    %v874 = vpack.c.bf16 %v873, %v873
    %v875 = vpack.c.bf16 %v837, %v837
    %877 = vrot.lane.b32.xlu0 %v875, 32
    %v878 = vpop.permute.xlu0 %877
    %v880 = vsel %vm148, %v878, 0
    %882 = vmatpush.bf16.msra.mxu0 0
    %883 = vmatpush.bf16.msra.mxu0 0
    %884 = vmatpush.bf16.msra.mxu0 0
    %885 = vmatpush.bf16.msra.mxu0 0
    %886 = vmatpush.bf16.msra.mxu0 0
    %887 = vmatpush.bf16.msra.mxu0 0
    %888 = vmatpush.bf16.msra.mxu0 %v143
    %889 = vmatpush.bf16.msra.mxu0 %v142
    %890 = vmatmul.bf16.gmra.mxu0 %v880
    %v891 = vpop.f32.mrf.mxu0
    %v892 = vadd.f32 0.0, %v891
    %v893 = vpop.f32.mrf.mxu0
    %894 = vdwg.mxu0
    %896 = vrot.lane.b32.xlu0 %v874, 32
    %v897 = vpop.permute.xlu0 %896
    %v899 = vsel %vm148, %v897, 0
    %901 = vmatpush.bf16.msra.mxu0 0
    %902 = vmatpush.bf16.msra.mxu0 0
    %903 = vmatpush.bf16.msra.mxu0 0
    %904 = vmatpush.bf16.msra.mxu0 0
    %905 = vmatpush.bf16.msra.mxu0 0
    %906 = vmatpush.bf16.msra.mxu0 0
    %907 = vmatpush.bf16.msra.mxu0 %v137
    %908 = vmatpush.bf16.msra.mxu0 %v136
    %909 = vmatmul.bf16.gmra.mxu0 %v899
    %v910 = vpop.f32.mrf.mxu0
    %v911 = vadd.f32 %v892, %v910
    %v912 = vpop.f32.mrf.mxu0
    %913 = vdwg.mxu0
    %v914 = vadd.f32 %v911, %v146
    %v915 = vmul.f32 %v914, 0.5
    %v916 = vtanh.pop %v915
    %v917 = vmul.f32 %v916, 0.5
    %v918 = vadd.f32 %v917, 0.5
    %v919 = vtanh.pop %v914
    %v920 = vmul.f32 %v918, %v831
    %922 = vrot.lane.b32.xlu0 %v919, 64
    %v923 = vpop.permute.xlu0 %922
    %v925 = vmul.f32 %v918, %v923
    %927 = vrot.lane.b32.xlu0 %v925, 32
    %v928 = vpop.permute.xlu0 %927
    %v930 = vadd.f32 %v920, %v928
    %v931 = vtanh.pop %v930
    %933 = vrot.lane.b32.xlu0 %v931, 64
    %v934 = vpop.permute.xlu0 %933
    %v936 = vmul.f32 %v918, %v934
    %v937 = vpack.c.bf16 %v936, %v936
    %v938 = vld [vmem:[%s7] sm:$0xff]
    %v939 = vld [vmem:[%s7 + $0x8] sm:$0xff]
    %v940 = vld [vmem:[%s7 + $0x10] sm:$0xff]
    %v941 = vld [vmem:[%s7 + $0x18] sm:$0xff]
    %v942 = vpack.c.bf16 %v939, %v938
    %v943 = vpack.c.bf16 %v941, %v940
    %v944 = vld [vmem:[%s8] sm:$0x1]
    %v946 = vperm.slane %v944, 0
    %949 = vrot.lane.b32.xlu0 %v937, 32
    %v950 = vpop.permute.xlu0 %949
    %v952 = vsel %vm148, %v950, 0
    %954 = vmatpush.bf16.msra.mxu0 0
    %955 = vmatpush.bf16.msra.mxu0 0
    %956 = vmatpush.bf16.msra.mxu0 0
    %957 = vmatpush.bf16.msra.mxu0 0
    %958 = vmatpush.bf16.msra.mxu0 0
    %959 = vmatpush.bf16.msra.mxu0 0
    %960 = vmatpush.bf16.msra.mxu0 %v943
    %961 = vmatpush.bf16.msra.mxu0 %v942
    %962 = vmatmul.bf16.gmra.mxu0 %v952
    %v963 = vpop.f32.mrf.mxu0
    %v964 = vadd.f32 %v946, %v963
    %v965 = vpop.f32.mrf.mxu0
    %966 = vdwg.mxu0
    %v967 = vmax.f32 %v964, 0.0
    %v968 = vpack.c.bf16 %v967, %v967
    %v969 = vld [vmem:[%s9] sm:$0xff]
    %v970 = vld [vmem:[%s9 + $0x8] sm:$0xff]
    %v971 = vpack.c.bf16 %v970, %v969
    %v972 = vld [vmem:[%s10] sm:$0x1]
    %v974 = vperm.slane %v972, 0
    %vm976 = vcmask 130048
    %v978 = vsel %vm976, %v968, 0
    %980 = vmatpush.bf16.msra.mxu0 0
    %981 = vmatpush.bf16.msra.mxu0 0
    %982 = vmatpush.bf16.msra.mxu0 0
    %983 = vmatpush.bf16.msra.mxu0 0
    %984 = vmatpush.bf16.msra.mxu0 0
    %985 = vmatpush.bf16.msra.mxu0 0
    %986 = vmatpush.bf16.msra.mxu0 0
    %987 = vmatpush.bf16.msra.mxu0 %v971
    %988 = vmatmul.bf16.gmra.mxu0 %v978
    %v989 = vpop.f32.mrf.mxu0
    %v990 = vadd.f32 %v974, %v989
    %v991 = vpop.f32.mrf.mxu0
    %992 = vdwg.mxu0
    %vm993 = vcmask 31744
    %994 = vst.msk [vmem:[%s11] sm:$0xff] %vm993, %v990
    // Predicated region
    $region50: #{tpu_custom_call.1} parent=1 // pred_check
      _
    $region51: #{tpu_custom_call.1} parent=1 // pred_check_branch
      %996 = sbr.rel (0) target = $region53
    $region52: #{tpu_custom_call.1} parent=1 // pred_region
      _
    $region53: #{tpu_custom_call.1} parent=1 // pred_fallthru
      _
    // Predicated region
    $region54: #{tpu_custom_call.1} parent=1 // pred_check
      _
    $region55: #{tpu_custom_call.1} parent=1 // pred_check_branch
      %998 = sbr.rel (0) target = $region57
    $region56: #{tpu_custom_call.1} parent=1 // pred_region
      _
    $region57: #{tpu_custom_call.1} parent=1 // pred_fallthru
      _
    %999 = vsyncpa [#allocation3], 1

</llo_original>
